<compile_context>
chip_gen: v6e
topology: v6e:2x2x1
jax: 0.10.0
libtpu: 0.0.40
codegen_flags: <defaults>
</compile_context>

<pallas_src>
import numpy as np
import jax
import jax.numpy as jnp
from jax.experimental import pallas as pl
from jax.experimental.pallas import tpu as pltpu


def _make_decoder_kernel(n_layers_fold1, n_layers_fold2):
    """Builds a kernel closed over the (static) layer counts of the two folds."""

    def kernel(code_ref, grid_ref, *refs):
        out_ref = refs[-1]
        p = refs[:-1]
        i = 0

        code = code_ref[0].astype(jnp.float32)                # [1, C]   (per-batch codeword)
        g = grid_ref[...].astype(jnp.float32)                 # [TN, 2]  (grid coordinates)

        # ---------------- Fold1 ----------------
        # first layer of Fold1: cat([grid, codeword]) @ W0 + b0
        #                     == grid @ W0[:2] + (codeword @ W0[2:] + b0)
        w_g, w_c, b = p[i][...], p[i + 1][...], p[i + 2][...]
        i += 3
        h = jnp.dot(g, w_g, preferred_element_type=jnp.float32)
        h = h + jnp.dot(code, w_c, preferred_element_type=jnp.float32) + b
        for _ in range(1, n_layers_fold1):
            h = jnp.maximum(h, 0.0)                            # ReLU between linears
            w, bb = p[i][...], p[i + 1][...]
            i += 2
            h = jnp.dot(h, w, preferred_element_type=jnp.float32) + bb
        f1 = h                                                 # [TN, dout1], no ReLU after last

        # ---------------- Fold2 ----------------
        # first layer of Fold2: cat([f1, codeword]) @ V0 + c0
        #                     == f1 @ V0[:dout1] + (codeword @ V0[dout1:] + c0)
        w_f, w_c2, b2 = p[i][...], p[i + 1][...], p[i + 2][...]
        i += 3
        h = jnp.dot(f1, w_f, preferred_element_type=jnp.float32)
        h = h + jnp.dot(code, w_c2, preferred_element_type=jnp.float32) + b2
        for _ in range(1, n_layers_fold2):
            h = jnp.maximum(h, 0.0)
            w, bb = p[i][...], p[i + 1][...]
            i += 2
            h = jnp.dot(h, w, preferred_element_type=jnp.float32) + bb

        out_ref[0] = h.astype(out_ref.dtype)                   # [TN, dout2]

    return kernel


def folding_net_decoder(points, grid, fold1_params, fold2_params, *, tile_n=128):
    """points: [B, C] codeword; grid: [N, 2]; fold*_params: list of (W[din,dout], b[dout])."""
    B, C = points.shape
    N = grid.shape[0]
    dout1 = fold1_params[-1][0].shape[1]
    dout2 = fold2_params[-1][0].shape[1]

    # N-tile: multiple of 8 (sublane alignment), at most tile_n.
    if N >= tile_n:
        tn = tile_n
    else:
        tn = ((N + 7) // 8) * 8
    n_pad = ((N + tn - 1) // tn) * tn
    grid_arr = grid if n_pad == N else jnp.pad(grid, ((0, n_pad - N), (0, 0)))

    # Split the first-layer weight of each fold so the concat is never materialized.
    w0, b0 = fold1_params[0]
    w0_grid, w0_code = w0[:2], w0[2:]
    v0, c0 = fold2_params[0]
    v0_prev, v0_code = v0[:dout1], v0[dout1:]

    flat_params = [w0_grid, w0_code, b0.reshape(1, -1)]
    for (w, b) in fold1_params[1:]:
        flat_params += [w, b.reshape(1, -1)]
    flat_params += [v0_prev, v0_code, c0.reshape(1, -1)]
    for (w, b) in fold2_params[1:]:
        flat_params += [w, b.reshape(1, -1)]

    code3 = points.reshape(B, 1, C)                            # (1, C) last-two-dims blocks

    kernel = _make_decoder_kernel(len(fold1_params), len(fold2_params))

    param_specs = [pl.BlockSpec(p.shape, lambda b, n: (0, 0)) for p in flat_params]

    out = pl.pallas_call(
        kernel,
        out_shape=jax.ShapeDtypeStruct((B, n_pad, dout2), points.dtype),
        grid_spec=pltpu.PrefetchScalarGridSpec(
            num_scalar_prefetch=0,
            grid=(B, n_pad // tn),
            in_specs=[
                pl.BlockSpec((1, 1, C), lambda b, n: (b, 0, 0)),   # per-batch codeword
                pl.BlockSpec((tn, 2), lambda b, n: (n, 0)),        # grid-point tile
            ] + param_specs,                                       # MLP weights/biases (full)
            out_specs=pl.BlockSpec((1, tn, dout2), lambda b, n: (b, n, 0)),
        ),
        compiler_params=pltpu.CompilerParams(
            dimension_semantics=("parallel", "parallel"),
        ),
    )(code3, grid_arr, *flat_params)

    return out[:, :N, :] if n_pad != N else out


# ----------------------------- reference & test ------------------------------

def _mlp(x, params):
    """PointwiseMLP with doLastRelu=False."""
    for i, (w, b) in enumerate(params):
        x = x @ w + b
        if i != len(params) - 1:
            x = jax.nn.relu(x)
    return x


def _reference(points, grid, fold1_params, fold2_params):
    """Pure-JAX mirror of the PyTorch FoldingNetDecoder.forward."""
    B, C = points.shape
    N = grid.shape[0]
    codeword = jnp.broadcast_to(points[:, None, :], (B, N, C))
    g = jnp.broadcast_to(grid[None], (B, N, 2))
    f = jnp.concatenate([g, codeword], axis=2)
    f = _mlp(f, fold1_params)
    f = jnp.concatenate([f, codeword], axis=2)
    f = _mlp(f, fold2_params)
    return f


def make_folding_grid(grid_dims):
    """Mirrors the PyTorch __init__ grid construction."""
    g0, g1 = grid_dims
    u_vals = jnp.arange(g0, dtype=jnp.float32) / g0 - 0.5
    v_vals = jnp.arange(g1, dtype=jnp.float32) / g1 - 0.5
    u = jnp.tile(u_vals, g1)          # .repeat(g1)
    v = jnp.repeat(v_vals, g0)        # .expand(g0,-1).t().reshape(-1)
    return jnp.stack([u, v], axis=1)  # [N, 2]


def init_mlp_params(key, dims):
    """Xavier-uniform (relu gain) weights; small nonzero biases so the bias path is tested."""
    params = []
    for i in range(1, len(dims)):
        key, kw, kb = jax.random.split(key, 3)
        gain = float(np.sqrt(2.0))
        bound = gain * float(np.sqrt(6.0 / (dims[i - 1] + dims[i])))
        w = jax.random.uniform(kw, (dims[i - 1], dims[i]),
                               minval=-bound, maxval=bound, dtype=jnp.float32)
        b = 0.1 * jax.random.normal(kb, (dims[i],), dtype=jnp.float32)
        params.append((w, b))
    return params


if __name__ == "__main__":
    B = 2
    C = 32                             # codeword size
    grid_dims = (8, 16)                # N = 128 grid points
    fold1_dims = (C + 2, 32, 32, 3)    # Folding1_dims
    fold2_dims = (C + 3, 32, 32, 3)    # Folding2_dims

    key = jax.random.PRNGKey(0)
    key, kp, k1, k2 = jax.random.split(key, 4)
    points = jax.random.normal(kp, (B, C), dtype=jnp.float32)
    fold1_params = init_mlp_params(k1, fold1_dims)
    fold2_params = init_mlp_params(k2, fold2_dims)
    grid_pts = make_folding_grid(grid_dims)

    out = folding_net_decoder(points, grid_pts, fold1_params, fold2_params)
    jax.block_until_ready(out)

    ref = _reference(points, grid_pts, fold1_params, fold2_params)
    assert out.shape == (B, grid_dims[0] * grid_dims[1], fold2_dims[-1])
    assert jnp.allclose(out, ref, atol=1e-4, rtol=1e-4)

    print("KERNEL_OK")
</pallas_src>

<mosaic_0001>
module attributes {stable_mosaic.version = 11 : i64} {
  func.func @kernel(%arg0: i32, %arg1: i32, %arg2: memref<1x1x32xf32, #tpu.memory_space<vmem>>, %arg3: memref<128x2xf32, #tpu.memory_space<vmem>>, %arg4: memref<2x32xf32, #tpu.memory_space<vmem>>, %arg5: memref<32x32xf32, #tpu.memory_space<vmem>>, %arg6: memref<1x32xf32, #tpu.memory_space<vmem>>, %arg7: memref<32x32xf32, #tpu.memory_space<vmem>>, %arg8: memref<1x32xf32, #tpu.memory_space<vmem>>, %arg9: memref<32x3xf32, #tpu.memory_space<vmem>>, %arg10: memref<1x3xf32, #tpu.memory_space<vmem>>, %arg11: memref<3x32xf32, #tpu.memory_space<vmem>>, %arg12: memref<32x32xf32, #tpu.memory_space<vmem>>, %arg13: memref<1x32xf32, #tpu.memory_space<vmem>>, %arg14: memref<32x32xf32, #tpu.memory_space<vmem>>, %arg15: memref<1x32xf32, #tpu.memory_space<vmem>>, %arg16: memref<32x3xf32, #tpu.memory_space<vmem>>, %arg17: memref<1x3xf32, #tpu.memory_space<vmem>>, %arg18: memref<1x128x3xf32, #tpu.memory_space<vmem>>) attributes {dimension_semantics = [#tpu.dimension_semantics<parallel>, #tpu.dimension_semantics<parallel>], iteration_bounds = array<i64: 2, 1>, scalar_prefetch = 0 : i64, scratch_operands = 0 : i64, tpu.core_type = #tpu.core_type<tc>, window_params = [{transform_indices = @transform_0, window_bounds = array<i64: 1, 1, 32>}, {transform_indices = @transform_1, window_bounds = array<i64: 128, 2>}, {pipeline_mode = #tpu.pipeline_mode<synchronous>, transform_indices = @transform_2, window_bounds = array<i64: 2, 32>}, {pipeline_mode = #tpu.pipeline_mode<synchronous>, transform_indices = @transform_3, window_bounds = array<i64: 32, 32>}, {pipeline_mode = #tpu.pipeline_mode<synchronous>, transform_indices = @transform_4, window_bounds = array<i64: 1, 32>}, {pipeline_mode = #tpu.pipeline_mode<synchronous>, transform_indices = @transform_5, window_bounds = array<i64: 32, 32>}, {pipeline_mode = #tpu.pipeline_mode<synchronous>, transform_indices = @transform_6, window_bounds = array<i64: 1, 32>}, {pipeline_mode = #tpu.pipeline_mode<synchronous>, transform_indices = @transform_7, window_bounds = array<i64: 32, 3>}, {pipeline_mode = #tpu.pipeline_mode<synchronous>, transform_indices = @transform_8, window_bounds = array<i64: 1, 3>}, {pipeline_mode = #tpu.pipeline_mode<synchronous>, transform_indices = @transform_9, window_bounds = array<i64: 3, 32>}, {pipeline_mode = #tpu.pipeline_mode<synchronous>, transform_indices = @transform_10, window_bounds = array<i64: 32, 32>}, {pipeline_mode = #tpu.pipeline_mode<synchronous>, transform_indices = @transform_11, window_bounds = array<i64: 1, 32>}, {pipeline_mode = #tpu.pipeline_mode<synchronous>, transform_indices = @transform_12, window_bounds = array<i64: 32, 32>}, {pipeline_mode = #tpu.pipeline_mode<synchronous>, transform_indices = @transform_13, window_bounds = array<i64: 1, 32>}, {pipeline_mode = #tpu.pipeline_mode<synchronous>, transform_indices = @transform_14, window_bounds = array<i64: 32, 3>}, {pipeline_mode = #tpu.pipeline_mode<synchronous>, transform_indices = @transform_15, window_bounds = array<i64: 1, 3>}, {transform_indices = @transform_16, window_bounds = array<i64: 1, 128, 3>}]} {
    %c0 = arith.constant 0 : index
    %c0_0 = arith.constant 0 : index
    %c0_1 = arith.constant 0 : index
    %0 = vector.load %arg2[%c0, %c0_0, %c0_1] : memref<1x1x32xf32, #tpu.memory_space<vmem>>, vector<1x1x32xf32>
    %1 = vector.shape_cast %0 : vector<1x1x32xf32> to vector<1x32xf32>
    %c0_2 = arith.constant 0 : index
    %c0_3 = arith.constant 0 : index
    %2 = vector.load %arg3[%c0_2, %c0_3] : memref<128x2xf32, #tpu.memory_space<vmem>>, vector<128x2xf32>
    %c0_4 = arith.constant 0 : index
    %c0_5 = arith.constant 0 : index
    %3 = vector.load %arg4[%c0_4, %c0_5] : memref<2x32xf32, #tpu.memory_space<vmem>>, vector<2x32xf32>
    %c0_6 = arith.constant 0 : index
    %c0_7 = arith.constant 0 : index
    %4 = vector.load %arg5[%c0_6, %c0_7] : memref<32x32xf32, #tpu.memory_space<vmem>>, vector<32x32xf32>
    %c0_8 = arith.constant 0 : index
    %c0_9 = arith.constant 0 : index
    %5 = vector.load %arg6[%c0_8, %c0_9] : memref<1x32xf32, #tpu.memory_space<vmem>>, vector<1x32xf32>
    %cst = arith.constant dense<0.000000e+00> : vector<128x32xf32>
    %6 = tpu.matmul %2, %3, %cst {dimension_numbers = #tpu.dot_dimension_numbers<[1], [0], [0], [1], [0, 0, 1, 1], [], []>} : vector<128x2xf32>, vector<2x32xf32>, vector<128x32xf32> -> vector<128x32xf32>
    %cst_10 = arith.constant dense<0.000000e+00> : vector<1x32xf32>
    %7 = tpu.matmul %1, %4, %cst_10 {dimension_numbers = #tpu.dot_dimension_numbers<[1], [0], [0], [1], [0, 0, 1, 1], [], []>} : vector<1x32xf32>, vector<32x32xf32>, vector<1x32xf32> -> vector<1x32xf32>
    %8 = vector.broadcast %7 : vector<1x32xf32> to vector<128x32xf32>
    %9 = arith.addf %6, %8 : vector<128x32xf32>
    %10 = vector.broadcast %5 : vector<1x32xf32> to vector<128x32xf32>
    %11 = arith.addf %9, %10 : vector<128x32xf32>
    %cst_11 = arith.constant 0.000000e+00 : f32
    %12 = vector.broadcast %cst_11 : f32 to vector<128x32xf32>
    %13 = arith.maximumf %11, %12 : vector<128x32xf32>
    %c0_12 = arith.constant 0 : index
    %c0_13 = arith.constant 0 : index
    %14 = vector.load %arg7[%c0_12, %c0_13] : memref<32x32xf32, #tpu.memory_space<vmem>>, vector<32x32xf32>
    %c0_14 = arith.constant 0 : index
    %c0_15 = arith.constant 0 : index
    %15 = vector.load %arg8[%c0_14, %c0_15] : memref<1x32xf32, #tpu.memory_space<vmem>>, vector<1x32xf32>
    %cst_16 = arith.constant dense<0.000000e+00> : vector<128x32xf32>
    %16 = tpu.matmul %13, %14, %cst_16 {dimension_numbers = #tpu.dot_dimension_numbers<[1], [0], [0], [1], [0, 0, 1, 1], [], []>} : vector<128x32xf32>, vector<32x32xf32>, vector<128x32xf32> -> vector<128x32xf32>
    %17 = vector.broadcast %15 : vector<1x32xf32> to vector<128x32xf32>
    %18 = arith.addf %16, %17 : vector<128x32xf32>
    %cst_17 = arith.constant 0.000000e+00 : f32
    %19 = vector.broadcast %cst_17 : f32 to vector<128x32xf32>
    %20 = arith.maximumf %18, %19 : vector<128x32xf32>
    %c0_18 = arith.constant 0 : index
    %c0_19 = arith.constant 0 : index
    %21 = vector.load %arg9[%c0_18, %c0_19] : memref<32x3xf32, #tpu.memory_space<vmem>>, vector<32x3xf32>
    %c0_20 = arith.constant 0 : index
    %c0_21 = arith.constant 0 : index
    %22 = vector.load %arg10[%c0_20, %c0_21] : memref<1x3xf32, #tpu.memory_space<vmem>>, vector<1x3xf32>
    %cst_22 = arith.constant dense<0.000000e+00> : vector<128x3xf32>
    %23 = tpu.matmul %20, %21, %cst_22 {dimension_numbers = #tpu.dot_dimension_numbers<[1], [0], [0], [1], [0, 0, 1, 1], [], []>} : vector<128x32xf32>, vector<32x3xf32>, vector<128x3xf32> -> vector<128x3xf32>
    %24 = vector.broadcast %22 : vector<1x3xf32> to vector<128x3xf32>
    %25 = arith.addf %23, %24 : vector<128x3xf32>
    %c0_23 = arith.constant 0 : index
    %c0_24 = arith.constant 0 : index
    %26 = vector.load %arg11[%c0_23, %c0_24] : memref<3x32xf32, #tpu.memory_space<vmem>>, vector<3x32xf32>
    %c0_25 = arith.constant 0 : index
    %c0_26 = arith.constant 0 : index
    %27 = vector.load %arg12[%c0_25, %c0_26] : memref<32x32xf32, #tpu.memory_space<vmem>>, vector<32x32xf32>
    %c0_27 = arith.constant 0 : index
    %c0_28 = arith.constant 0 : index
    %28 = vector.load %arg13[%c0_27, %c0_28] : memref<1x32xf32, #tpu.memory_space<vmem>>, vector<1x32xf32>
    %cst_29 = arith.constant dense<0.000000e+00> : vector<128x32xf32>
    %29 = tpu.matmul %25, %26, %cst_29 {dimension_numbers = #tpu.dot_dimension_numbers<[1], [0], [0], [1], [0, 0, 1, 1], [], []>} : vector<128x3xf32>, vector<3x32xf32>, vector<128x32xf32> -> vector<128x32xf32>
    %cst_30 = arith.constant dense<0.000000e+00> : vector<1x32xf32>
    %30 = tpu.matmul %1, %27, %cst_30 {dimension_numbers = #tpu.dot_dimension_numbers<[1], [0], [0], [1], [0, 0, 1, 1], [], []>} : vector<1x32xf32>, vector<32x32xf32>, vector<1x32xf32> -> vector<1x32xf32>
    %31 = vector.broadcast %30 : vector<1x32xf32> to vector<128x32xf32>
    %32 = arith.addf %29, %31 : vector<128x32xf32>
    %33 = vector.broadcast %28 : vector<1x32xf32> to vector<128x32xf32>
    %34 = arith.addf %32, %33 : vector<128x32xf32>
    %cst_31 = arith.constant 0.000000e+00 : f32
    %35 = vector.broadcast %cst_31 : f32 to vector<128x32xf32>
    %36 = arith.maximumf %34, %35 : vector<128x32xf32>
    %c0_32 = arith.constant 0 : index
    %c0_33 = arith.constant 0 : index
    %37 = vector.load %arg14[%c0_32, %c0_33] : memref<32x32xf32, #tpu.memory_space<vmem>>, vector<32x32xf32>
    %c0_34 = arith.constant 0 : index
    %c0_35 = arith.constant 0 : index
    %38 = vector.load %arg15[%c0_34, %c0_35] : memref<1x32xf32, #tpu.memory_space<vmem>>, vector<1x32xf32>
    %cst_36 = arith.constant dense<0.000000e+00> : vector<128x32xf32>
    %39 = tpu.matmul %36, %37, %cst_36 {dimension_numbers = #tpu.dot_dimension_numbers<[1], [0], [0], [1], [0, 0, 1, 1], [], []>} : vector<128x32xf32>, vector<32x32xf32>, vector<128x32xf32> -> vector<128x32xf32>
    %40 = vector.broadcast %38 : vector<1x32xf32> to vector<128x32xf32>
    %41 = arith.addf %39, %40 : vector<128x32xf32>
    %cst_37 = arith.constant 0.000000e+00 : f32
    %42 = vector.broadcast %cst_37 : f32 to vector<128x32xf32>
    %43 = arith.maximumf %41, %42 : vector<128x32xf32>
    %c0_38 = arith.constant 0 : index
    %c0_39 = arith.constant 0 : index
    %44 = vector.load %arg16[%c0_38, %c0_39] : memref<32x3xf32, #tpu.memory_space<vmem>>, vector<32x3xf32>
    %c0_40 = arith.constant 0 : index
    %c0_41 = arith.constant 0 : index
    %45 = vector.load %arg17[%c0_40, %c0_41] : memref<1x3xf32, #tpu.memory_space<vmem>>, vector<1x3xf32>
    %cst_42 = arith.constant dense<0.000000e+00> : vector<128x3xf32>
    %46 = tpu.matmul %43, %44, %cst_42 {dimension_numbers = #tpu.dot_dimension_numbers<[1], [0], [0], [1], [0, 0, 1, 1], [], []>} : vector<128x32xf32>, vector<32x3xf32>, vector<128x3xf32> -> vector<128x3xf32>
    %47 = vector.broadcast %45 : vector<1x3xf32> to vector<128x3xf32>
    %48 = arith.addf %46, %47 : vector<128x3xf32>
    %c0_43 = arith.constant 0 : index
    %c0_44 = arith.constant 0 : index
    %c0_45 = arith.constant 0 : index
    %49 = vector.load %arg18[%c0_43, %c0_44, %c0_45] : memref<1x128x3xf32, #tpu.memory_space<vmem>>, vector<1x128x3xf32>
    %50 = vector.shape_cast %49 : vector<1x128x3xf32> to vector<128x3xf32>
    %51 = vector.shape_cast %48 : vector<128x3xf32> to vector<1x128x3xf32>
    tpu.vector_store %arg18[%c0_43, %c0_44, %c0_45], %51 {strides = array<i32>} : memref<1x128x3xf32, #tpu.memory_space<vmem>>, vector<1x128x3xf32>,
    return
  }
  func.func @transform_0(%arg0: i32, %arg1: i32) -> (i32, i32, i32) {
    %c0_i32 = arith.constant 0 : i32
    %c0_i32_0 = arith.constant 0 : i32
    %c0_i32_1 = arith.constant 0 : i32
    return %arg0, %c0_i32, %c0_i32_0 : i32, i32, i32
  }
  func.func @transform_1(%arg0: i32, %arg1: i32) -> (i32, i32) {
    %c0_i32 = arith.constant 0 : i32
    %c0_i32_0 = arith.constant 0 : i32
    return %arg1, %c0_i32 : i32, i32
  }
  func.func @transform_2(%arg0: i32, %arg1: i32) -> (i32, i32) {
    %c0_i32 = arith.constant 0 : i32
    %c0_i32_0 = arith.constant 0 : i32
    %c0_i32_1 = arith.constant 0 : i32
    return %c0_i32, %c0_i32_0 : i32, i32
  }
  func.func @transform_3(%arg0: i32, %arg1: i32) -> (i32, i32) {
    %c0_i32 = arith.constant 0 : i32
    %c0_i32_0 = arith.constant 0 : i32
    %c0_i32_1 = arith.constant 0 : i32
    return %c0_i32, %c0_i32_0 : i32, i32
  }
  func.func @transform_4(%arg0: i32, %arg1: i32) -> (i32, i32) {
    %c0_i32 = arith.constant 0 : i32
    %c0_i32_0 = arith.constant 0 : i32
    %c0_i32_1 = arith.constant 0 : i32
    return %c0_i32, %c0_i32_0 : i32, i32
  }
  func.func @transform_5(%arg0: i32, %arg1: i32) -> (i32, i32) {
    %c0_i32 = arith.constant 0 : i32
    %c0_i32_0 = arith.constant 0 : i32
    %c0_i32_1 = arith.constant 0 : i32
    return %c0_i32, %c0_i32_0 : i32, i32
  }
  func.func @transform_6(%arg0: i32, %arg1: i32) -> (i32, i32) {
    %c0_i32 = arith.constant 0 : i32
    %c0_i32_0 = arith.constant 0 : i32
    %c0_i32_1 = arith.constant 0 : i32
    return %c0_i32, %c0_i32_0 : i32, i32
  }
  func.func @transform_7(%arg0: i32, %arg1: i32) -> (i32, i32) {
    %c0_i32 = arith.constant 0 : i32
    %c0_i32_0 = arith.constant 0 : i32
    %c0_i32_1 = arith.constant 0 : i32
    return %c0_i32, %c0_i32_0 : i32, i32
  }
  func.func @transform_8(%arg0: i32, %arg1: i32) -> (i32, i32) {
    %c0_i32 = arith.constant 0 : i32
    %c0_i32_0 = arith.constant 0 : i32
    %c0_i32_1 = arith.constant 0 : i32
    return %c0_i32, %c0_i32_0 : i32, i32
  }
  func.func @transform_9(%arg0: i32, %arg1: i32) -> (i32, i32) {
    %c0_i32 = arith.constant 0 : i32
    %c0_i32_0 = arith.constant 0 : i32
    %c0_i32_1 = arith.constant 0 : i32
    return %c0_i32, %c0_i32_0 : i32, i32
  }
  func.func @transform_10(%arg0: i32, %arg1: i32) -> (i32, i32) {
    %c0_i32 = arith.constant 0 : i32
    %c0_i32_0 = arith.constant 0 : i32
    %c0_i32_1 = arith.constant 0 : i32
    return %c0_i32, %c0_i32_0 : i32, i32
  }
  func.func @transform_11(%arg0: i32, %arg1: i32) -> (i32, i32) {
    %c0_i32 = arith.constant 0 : i32
    %c0_i32_0 = arith.constant 0 : i32
    %c0_i32_1 = arith.constant 0 : i32
    return %c0_i32, %c0_i32_0 : i32, i32
  }
  func.func @transform_12(%arg0: i32, %arg1: i32) -> (i32, i32) {
    %c0_i32 = arith.constant 0 : i32
    %c0_i32_0 = arith.constant 0 : i32
    %c0_i32_1 = arith.constant 0 : i32
    return %c0_i32, %c0_i32_0 : i32, i32
  }
  func.func @transform_13(%arg0: i32, %arg1: i32) -> (i32, i32) {
    %c0_i32 = arith.constant 0 : i32
    %c0_i32_0 = arith.constant 0 : i32
    %c0_i32_1 = arith.constant 0 : i32
    return %c0_i32, %c0_i32_0 : i32, i32
  }
  func.func @transform_14(%arg0: i32, %arg1: i32) -> (i32, i32) {
    %c0_i32 = arith.constant 0 : i32
    %c0_i32_0 = arith.constant 0 : i32
    %c0_i32_1 = arith.constant 0 : i32
    return %c0_i32, %c0_i32_0 : i32, i32
  }
  func.func @transform_15(%arg0: i32, %arg1: i32) -> (i32, i32) {
    %c0_i32 = arith.constant 0 : i32
    %c0_i32_0 = arith.constant 0 : i32
    %c0_i32_1 = arith.constant 0 : i32
    return %c0_i32, %c0_i32_0 : i32, i32
  }
  func.func @transform_16(%arg0: i32, %arg1: i32) -> (i32, i32, i32) {
    %c0_i32 = arith.constant 0 : i32
    %c0_i32_0 = arith.constant 0 : i32
    return %arg0, %arg1, %c0_i32 : i32, i32, i32
  }
}

</mosaic_0001>

<llo_original>
// kernel: tpu_custom_call.1
$region0: #{tpu_custom_call.1}
  #allocation0 [shape = 'u32[]', space=smem, size = 0x4, offset = 0x4, fixed_abs, tag = 'smem constant byte address 0x4 - core index']
  #allocation1 [shape = 'u32[144,128]{1,0:T(1,128)}', space=vmem, size = 0x12000, scoped, tag = 'internal scratch']
  %s0 = inlined_call_operand.vmem [shape: f32[2,1,32], index: 0, kind: input, shape index: {}]
  %s1 = inlined_call_operand.vmem [shape: f32[128,2], index: 1, kind: input, shape index: {}]
  %s2 = inlined_call_operand.vmem [shape: f32[2,32], index: 2, kind: input, shape index: {}]
  %s3 = inlined_call_operand.vmem [shape: f32[32,32], index: 3, kind: input, shape index: {}]
  %s4 = inlined_call_operand.vmem [shape: f32[1,32], index: 4, kind: input, shape index: {}]
  %s5 = inlined_call_operand.vmem [shape: f32[32,32], index: 5, kind: input, shape index: {}]
  %s6 = inlined_call_operand.vmem [shape: f32[1,32], index: 6, kind: input, shape index: {}]
  %s7 = inlined_call_operand.vmem [shape: f32[32,3], index: 7, kind: input, shape index: {}]
  %s8 = inlined_call_operand.vmem [shape: f32[1,3], index: 8, kind: input, shape index: {}]
  %s9 = inlined_call_operand.vmem [shape: f32[3,32], index: 9, kind: input, shape index: {}]
  %s10 = inlined_call_operand.vmem [shape: f32[32,32], index: 10, kind: input, shape index: {}]
  %s11 = inlined_call_operand.vmem [shape: f32[1,32], index: 11, kind: input, shape index: {}]
  %s12 = inlined_call_operand.vmem [shape: f32[32,32], index: 12, kind: input, shape index: {}]
  %s13 = inlined_call_operand.vmem [shape: f32[1,32], index: 13, kind: input, shape index: {}]
  %s14 = inlined_call_operand.vmem [shape: f32[32,3], index: 14, kind: input, shape index: {}]
  %s15 = inlined_call_operand.vmem [shape: f32[1,3], index: 15, kind: input, shape index: {}]
  %s16 = inlined_call_operand.vmem [shape: f32[2,128,3], index: 16, kind: output, shape index: {}]
  %s17 = sld [smem:[#allocation0]]
  $region97: #{tpu_custom_call.1} parent=0
    _
  %s19 = ssub.s32 1, %s17
  %s20 = scalar_select 0, %s19, %s17
  loop: start=0, step=1, limit=4
  $region2: #{tpu_custom_call.1} parent=0 // loop_pre_header
    _
  $region3: #{tpu_custom_call.1} parent=0 // loop_header
    %s22 = sphi 0, %s26
    %p23 = scmp.ge.s32.totalorder %s22, 4
    %s29 = sphi 0, %s41
    %s30 = sphi 0, %s37
    %s31 = sphi 0, %s29
    %s32 = sphi 0, %s30
    %s33 = sphi 0, %s31
    %s34 = sphi 0, %s32
    %s44 = sphi 0, %s46
    %s47 = sphi 0, %s44
    %s48 = sphi 0, %s47
    %s64 = sphi 0, %s48
    %s70 = sphi 0, %s72
    %s73 = sphi 0, %s70
    %s74 = sphi 0, %s73
    %s90 = sphi 0, %s74
    %s94 = sphi 0, %s94
    %s96 = sphi 0, %s94
    %s97 = sphi 0, %s96
    %s111 = sphi 0, %s97
    %s115 = sphi 0, %s115
    %s117 = sphi 0, %s115
    %s118 = sphi 0, %s117
    %s132 = sphi 0, %s118
    %s136 = sphi 0, %s136
    %s138 = sphi 0, %s136
    %s139 = sphi 0, %s138
    %s153 = sphi 0, %s139
    %s157 = sphi 0, %s157
    %s159 = sphi 0, %s157
    %s160 = sphi 0, %s159
    %s174 = sphi 0, %s160
    %s178 = sphi 0, %s178
    %s180 = sphi 0, %s178
    %s181 = sphi 0, %s180
    %s195 = sphi 0, %s181
    %s199 = sphi 0, %s199
    %s201 = sphi 0, %s199
    %s202 = sphi 0, %s201
    %s216 = sphi 0, %s202
    %s220 = sphi 0, %s220
    %s222 = sphi 0, %s220
    %s223 = sphi 0, %s222
    %s237 = sphi 0, %s223
    %s241 = sphi 0, %s241
    %s243 = sphi 0, %s241
    %s244 = sphi 0, %s243
    %s258 = sphi 0, %s244
    %s262 = sphi 0, %s262
    %s264 = sphi 0, %s262
    %s265 = sphi 0, %s264
    %s279 = sphi 0, %s265
    %s283 = sphi 0, %s283
    %s285 = sphi 0, %s283
    %s286 = sphi 0, %s285
    %s300 = sphi 0, %s286
    %s304 = sphi 0, %s304
    %s306 = sphi 0, %s304
    %s307 = sphi 0, %s306
    %s321 = sphi 0, %s307
    %s325 = sphi 0, %s325
    %s327 = sphi 0, %s325
    %s328 = sphi 0, %s327
    %s342 = sphi 0, %s328
    %s346 = sphi 0, %s346
    %s348 = sphi 0, %s346
    %s349 = sphi 0, %s348
    %s363 = sphi 0, %s349
    %s367 = sphi 0, %s367
    %s369 = sphi 0, %s367
    %s370 = sphi 0, %s369
    %s384 = sphi 0, %s370
    %s392 = sphi 0, %s394
    %s395 = sphi 0, %s392
    %s396 = sphi 0, %s395
    %s412 = sphi 0, %s396
  $region4: #{tpu_custom_call.1} parent=0 // loop_header_branch
    %25 = sbr.rel (%p23) target = $region8
  $region5: #{tpu_custom_call.1} parent=0 // loop_body
    %s27 = ssub.s32 %s22, 1
    %s28 = ssub.s32 %s22, 2
    %s35 = sadd.s32 1, %s30
    %p36 = scmp.ge.s32.totalorder %s35, 1
    %s37 = scalar_select %p36, 0, %s35
    %s38 = sadd.s32 1, %s29
    %s39 = scalar_select %p36, %s38, %s29
    %p40 = scmp.ge.s32.totalorder %s39, 2
    %s41 = scalar_select %p40, 0, %s39
    %s42 = ssub.s32 %s29, %s41
    %p43 = scmp.eq.s32.totalorder %s42, 0
    %s45 = sadd.s32 %s44, 1
    %s46 = scalar_select %p43, %s44, %s45
    %p49 = pneg %p43
    %p50 = scmp.eq.s32.totalorder %s22, 1
    %p51 = por %p49, %p50
    %p52 = scmp.ne.s32.totalorder %s44, %s47
    %p53 = scmp.eq.s32.totalorder %s22, 0
    %p54 = por %p52, %p53
    %p55 = scmp.ne.s32.totalorder %s44, %s47
    %p56 = scmp.eq.s32.totalorder %s27, 1
    %p57 = por %p55, %p56
    %p58 = scmp.ne.s32.totalorder %s47, %s48
    %p59 = scmp.eq.s32.totalorder %s27, 0
    %p60 = por %p58, %p59
    %p61 = scmp.ne.s32.totalorder %s47, %s48
    %p62 = scmp.eq.s32.totalorder %s28, 1
    %p63 = por %p61, %p62
    %p65 = scmp.ne.s32.totalorder %s48, %s64
    %p66 = scmp.eq.s32.totalorder %s28, 0
    %p67 = por %p65, %p66
    %s68 = ssub.s32 %s30, %s37
    %p69 = scmp.eq.s32.totalorder %s68, 0
    %s71 = sadd.s32 %s70, 1
    %s72 = scalar_select %p69, %s70, %s71
    %p75 = pneg %p69
    %p76 = scmp.eq.s32.totalorder %s22, 1
    %p77 = por %p75, %p76
    %p78 = scmp.ne.s32.totalorder %s70, %s73
    %p79 = scmp.eq.s32.totalorder %s22, 0
    %p80 = por %p78, %p79
    %p81 = scmp.ne.s32.totalorder %s70, %s73
    %p82 = scmp.eq.s32.totalorder %s27, 1
    %p83 = por %p81, %p82
    %p84 = scmp.ne.s32.totalorder %s73, %s74
    %p85 = scmp.eq.s32.totalorder %s27, 0
    %p86 = por %p84, %p85
    %p87 = scmp.ne.s32.totalorder %s73, %s74
    %p88 = scmp.eq.s32.totalorder %s28, 1
    %p89 = por %p87, %p88
    %p91 = scmp.ne.s32.totalorder %s74, %s90
    %p92 = scmp.eq.s32.totalorder %s28, 0
    %p93 = por %p91, %p92
    %s95 = sadd.s32 %s94, 1
    %p98 = scmp.eq.s32.totalorder %s22, 1
    %p99 = scmp.ne.s32.totalorder %s94, %s96
    %p100 = scmp.eq.s32.totalorder %s22, 0
    %p101 = por %p99, %p100
    %p102 = scmp.ne.s32.totalorder %s94, %s96
    %p103 = scmp.eq.s32.totalorder %s27, 1
    %p104 = por %p102, %p103
    %p105 = scmp.ne.s32.totalorder %s96, %s97
    %p106 = scmp.eq.s32.totalorder %s27, 0
    %p107 = por %p105, %p106
    %p108 = scmp.ne.s32.totalorder %s96, %s97
    %p109 = scmp.eq.s32.totalorder %s28, 1
    %p110 = por %p108, %p109
    %p112 = scmp.ne.s32.totalorder %s97, %s111
    %p113 = scmp.eq.s32.totalorder %s28, 0
    %p114 = por %p112, %p113
    %s116 = sadd.s32 %s115, 1
    %p119 = scmp.eq.s32.totalorder %s22, 1
    %p120 = scmp.ne.s32.totalorder %s115, %s117
    %p121 = scmp.eq.s32.totalorder %s22, 0
    %p122 = por %p120, %p121
    %p123 = scmp.ne.s32.totalorder %s115, %s117
    %p124 = scmp.eq.s32.totalorder %s27, 1
    %p125 = por %p123, %p124
    %p126 = scmp.ne.s32.totalorder %s117, %s118
    %p127 = scmp.eq.s32.totalorder %s27, 0
    %p128 = por %p126, %p127
    %p129 = scmp.ne.s32.totalorder %s117, %s118
    %p130 = scmp.eq.s32.totalorder %s28, 1
    %p131 = por %p129, %p130
    %p133 = scmp.ne.s32.totalorder %s118, %s132
    %p134 = scmp.eq.s32.totalorder %s28, 0
    %p135 = por %p133, %p134
    %s137 = sadd.s32 %s136, 1
    %p140 = scmp.eq.s32.totalorder %s22, 1
    %p141 = scmp.ne.s32.totalorder %s136, %s138
    %p142 = scmp.eq.s32.totalorder %s22, 0
    %p143 = por %p141, %p142
    %p144 = scmp.ne.s32.totalorder %s136, %s138
    %p145 = scmp.eq.s32.totalorder %s27, 1
    %p146 = por %p144, %p145
    %p147 = scmp.ne.s32.totalorder %s138, %s139
    %p148 = scmp.eq.s32.totalorder %s27, 0
    %p149 = por %p147, %p148
    %p150 = scmp.ne.s32.totalorder %s138, %s139
    %p151 = scmp.eq.s32.totalorder %s28, 1
    %p152 = por %p150, %p151
    %p154 = scmp.ne.s32.totalorder %s139, %s153
    %p155 = scmp.eq.s32.totalorder %s28, 0
    %p156 = por %p154, %p155
    %s158 = sadd.s32 %s157, 1
    %p161 = scmp.eq.s32.totalorder %s22, 1
    %p162 = scmp.ne.s32.totalorder %s157, %s159
    %p163 = scmp.eq.s32.totalorder %s22, 0
    %p164 = por %p162, %p163
    %p165 = scmp.ne.s32.totalorder %s157, %s159
    %p166 = scmp.eq.s32.totalorder %s27, 1
    %p167 = por %p165, %p166
    %p168 = scmp.ne.s32.totalorder %s159, %s160
    %p169 = scmp.eq.s32.totalorder %s27, 0
    %p170 = por %p168, %p169
    %p171 = scmp.ne.s32.totalorder %s159, %s160
    %p172 = scmp.eq.s32.totalorder %s28, 1
    %p173 = por %p171, %p172
    %p175 = scmp.ne.s32.totalorder %s160, %s174
    %p176 = scmp.eq.s32.totalorder %s28, 0
    %p177 = por %p175, %p176
    %s179 = sadd.s32 %s178, 1
    %p182 = scmp.eq.s32.totalorder %s22, 1
    %p183 = scmp.ne.s32.totalorder %s178, %s180
    %p184 = scmp.eq.s32.totalorder %s22, 0
    %p185 = por %p183, %p184
    %p186 = scmp.ne.s32.totalorder %s178, %s180
    %p187 = scmp.eq.s32.totalorder %s27, 1
    %p188 = por %p186, %p187
    %p189 = scmp.ne.s32.totalorder %s180, %s181
    %p190 = scmp.eq.s32.totalorder %s27, 0
    %p191 = por %p189, %p190
    %p192 = scmp.ne.s32.totalorder %s180, %s181
    %p193 = scmp.eq.s32.totalorder %s28, 1
    %p194 = por %p192, %p193
    %p196 = scmp.ne.s32.totalorder %s181, %s195
    %p197 = scmp.eq.s32.totalorder %s28, 0
    %p198 = por %p196, %p197
    %s200 = sadd.s32 %s199, 1
    %p203 = scmp.eq.s32.totalorder %s22, 1
    %p204 = scmp.ne.s32.totalorder %s199, %s201
    %p205 = scmp.eq.s32.totalorder %s22, 0
    %p206 = por %p204, %p205
    %p207 = scmp.ne.s32.totalorder %s199, %s201
    %p208 = scmp.eq.s32.totalorder %s27, 1
    %p209 = por %p207, %p208
    %p210 = scmp.ne.s32.totalorder %s201, %s202
    %p211 = scmp.eq.s32.totalorder %s27, 0
    %p212 = por %p210, %p211
    %p213 = scmp.ne.s32.totalorder %s201, %s202
    %p214 = scmp.eq.s32.totalorder %s28, 1
    %p215 = por %p213, %p214
    %p217 = scmp.ne.s32.totalorder %s202, %s216
    %p218 = scmp.eq.s32.totalorder %s28, 0
    %p219 = por %p217, %p218
    %s221 = sadd.s32 %s220, 1
    %p224 = scmp.eq.s32.totalorder %s22, 1
    %p225 = scmp.ne.s32.totalorder %s220, %s222
    %p226 = scmp.eq.s32.totalorder %s22, 0
    %p227 = por %p225, %p226
    %p228 = scmp.ne.s32.totalorder %s220, %s222
    %p229 = scmp.eq.s32.totalorder %s27, 1
    %p230 = por %p228, %p229
    %p231 = scmp.ne.s32.totalorder %s222, %s223
    %p232 = scmp.eq.s32.totalorder %s27, 0
    %p233 = por %p231, %p232
    %p234 = scmp.ne.s32.totalorder %s222, %s223
    %p235 = scmp.eq.s32.totalorder %s28, 1
    %p236 = por %p234, %p235
    %p238 = scmp.ne.s32.totalorder %s223, %s237
    %p239 = scmp.eq.s32.totalorder %s28, 0
    %p240 = por %p238, %p239
    %s242 = sadd.s32 %s241, 1
    %p245 = scmp.eq.s32.totalorder %s22, 1
    %p246 = scmp.ne.s32.totalorder %s241, %s243
    %p247 = scmp.eq.s32.totalorder %s22, 0
    %p248 = por %p246, %p247
    %p249 = scmp.ne.s32.totalorder %s241, %s243
    %p250 = scmp.eq.s32.totalorder %s27, 1
    %p251 = por %p249, %p250
    %p252 = scmp.ne.s32.totalorder %s243, %s244
    %p253 = scmp.eq.s32.totalorder %s27, 0
    %p254 = por %p252, %p253
    %p255 = scmp.ne.s32.totalorder %s243, %s244
    %p256 = scmp.eq.s32.totalorder %s28, 1
    %p257 = por %p255, %p256
    %p259 = scmp.ne.s32.totalorder %s244, %s258
    %p260 = scmp.eq.s32.totalorder %s28, 0
    %p261 = por %p259, %p260
    %s263 = sadd.s32 %s262, 1
    %p266 = scmp.eq.s32.totalorder %s22, 1
    %p267 = scmp.ne.s32.totalorder %s262, %s264
    %p268 = scmp.eq.s32.totalorder %s22, 0
    %p269 = por %p267, %p268
    %p270 = scmp.ne.s32.totalorder %s262, %s264
    %p271 = scmp.eq.s32.totalorder %s27, 1
    %p272 = por %p270, %p271
    %p273 = scmp.ne.s32.totalorder %s264, %s265
    %p274 = scmp.eq.s32.totalorder %s27, 0
    %p275 = por %p273, %p274
    %p276 = scmp.ne.s32.totalorder %s264, %s265
    %p277 = scmp.eq.s32.totalorder %s28, 1
    %p278 = por %p276, %p277
    %p280 = scmp.ne.s32.totalorder %s265, %s279
    %p281 = scmp.eq.s32.totalorder %s28, 0
    %p282 = por %p280, %p281
    %s284 = sadd.s32 %s283, 1
    %p287 = scmp.eq.s32.totalorder %s22, 1
    %p288 = scmp.ne.s32.totalorder %s283, %s285
    %p289 = scmp.eq.s32.totalorder %s22, 0
    %p290 = por %p288, %p289
    %p291 = scmp.ne.s32.totalorder %s283, %s285
    %p292 = scmp.eq.s32.totalorder %s27, 1
    %p293 = por %p291, %p292
    %p294 = scmp.ne.s32.totalorder %s285, %s286
    %p295 = scmp.eq.s32.totalorder %s27, 0
    %p296 = por %p294, %p295
    %p297 = scmp.ne.s32.totalorder %s285, %s286
    %p298 = scmp.eq.s32.totalorder %s28, 1
    %p299 = por %p297, %p298
    %p301 = scmp.ne.s32.totalorder %s286, %s300
    %p302 = scmp.eq.s32.totalorder %s28, 0
    %p303 = por %p301, %p302
    %s305 = sadd.s32 %s304, 1
    %p308 = scmp.eq.s32.totalorder %s22, 1
    %p309 = scmp.ne.s32.totalorder %s304, %s306
    %p310 = scmp.eq.s32.totalorder %s22, 0
    %p311 = por %p309, %p310
    %p312 = scmp.ne.s32.totalorder %s304, %s306
    %p313 = scmp.eq.s32.totalorder %s27, 1
    %p314 = por %p312, %p313
    %p315 = scmp.ne.s32.totalorder %s306, %s307
    %p316 = scmp.eq.s32.totalorder %s27, 0
    %p317 = por %p315, %p316
    %p318 = scmp.ne.s32.totalorder %s306, %s307
    %p319 = scmp.eq.s32.totalorder %s28, 1
    %p320 = por %p318, %p319
    %p322 = scmp.ne.s32.totalorder %s307, %s321
    %p323 = scmp.eq.s32.totalorder %s28, 0
    %p324 = por %p322, %p323
    %s326 = sadd.s32 %s325, 1
    %p329 = scmp.eq.s32.totalorder %s22, 1
    %p330 = scmp.ne.s32.totalorder %s325, %s327
    %p331 = scmp.eq.s32.totalorder %s22, 0
    %p332 = por %p330, %p331
    %p333 = scmp.ne.s32.totalorder %s325, %s327
    %p334 = scmp.eq.s32.totalorder %s27, 1
    %p335 = por %p333, %p334
    %p336 = scmp.ne.s32.totalorder %s327, %s328
    %p337 = scmp.eq.s32.totalorder %s27, 0
    %p338 = por %p336, %p337
    %p339 = scmp.ne.s32.totalorder %s327, %s328
    %p340 = scmp.eq.s32.totalorder %s28, 1
    %p341 = por %p339, %p340
    %p343 = scmp.ne.s32.totalorder %s328, %s342
    %p344 = scmp.eq.s32.totalorder %s28, 0
    %p345 = por %p343, %p344
    %s347 = sadd.s32 %s346, 1
    %p350 = scmp.eq.s32.totalorder %s22, 1
    %p351 = scmp.ne.s32.totalorder %s346, %s348
    %p352 = scmp.eq.s32.totalorder %s22, 0
    %p353 = por %p351, %p352
    %p354 = scmp.ne.s32.totalorder %s346, %s348
    %p355 = scmp.eq.s32.totalorder %s27, 1
    %p356 = por %p354, %p355
    %p357 = scmp.ne.s32.totalorder %s348, %s349
    %p358 = scmp.eq.s32.totalorder %s27, 0
    %p359 = por %p357, %p358
    %p360 = scmp.ne.s32.totalorder %s348, %s349
    %p361 = scmp.eq.s32.totalorder %s28, 1
    %p362 = por %p360, %p361
    %p364 = scmp.ne.s32.totalorder %s349, %s363
    %p365 = scmp.eq.s32.totalorder %s28, 0
    %p366 = por %p364, %p365
    %s368 = sadd.s32 %s367, 1
    %p371 = scmp.eq.s32.totalorder %s22, 1
    %p372 = scmp.ne.s32.totalorder %s367, %s369
    %p373 = scmp.eq.s32.totalorder %s22, 0
    %p374 = por %p372, %p373
    %p375 = scmp.ne.s32.totalorder %s367, %s369
    %p376 = scmp.eq.s32.totalorder %s27, 1
    %p377 = por %p375, %p376
    %p378 = scmp.ne.s32.totalorder %s369, %s370
    %p379 = scmp.eq.s32.totalorder %s27, 0
    %p380 = por %p378, %p379
    %p381 = scmp.ne.s32.totalorder %s369, %s370
    %p382 = scmp.eq.s32.totalorder %s28, 1
    %p383 = por %p381, %p382
    %p385 = scmp.ne.s32.totalorder %s370, %s384
    %p386 = scmp.eq.s32.totalorder %s28, 0
    %p387 = por %p385, %p386
    %s388 = ssub.s32 %s29, %s41
    %s389 = ssub.s32 %s30, %s37
    %s390 = sor.u32 %s388, %s389
    %p391 = scmp.eq.s32.totalorder %s390, 0
    %s393 = sadd.s32 %s392, 1
    %s394 = scalar_select %p391, %s392, %s393
    %p397 = pneg %p391
    %p398 = scmp.eq.s32.totalorder %s22, 1
    %p399 = por %p397, %p398
    %p400 = scmp.ne.s32.totalorder %s392, %s395
    %p401 = scmp.eq.s32.totalorder %s22, 0
    %p402 = por %p400, %p401
    %p403 = scmp.ne.s32.totalorder %s392, %s395
    %p404 = scmp.eq.s32.totalorder %s27, 1
    %p405 = por %p403, %p404
    %p406 = scmp.ne.s32.totalorder %s395, %s396
    %p407 = scmp.eq.s32.totalorder %s27, 0
    %p408 = por %p406, %p407
    %p409 = scmp.ne.s32.totalorder %s395, %s396
    %p410 = scmp.eq.s32.totalorder %s28, 1
    %p411 = por %p409, %p410
    %p413 = scmp.ne.s32.totalorder %s396, %s412
    %p414 = scmp.eq.s32.totalorder %s28, 0
    %p415 = por %p413, %p414
    %p416 = scmp.le.s32.totalorder 1, %s22
    %p417 = scmp.lt.s32.totalorder %s22, 3
    %p418 = pnand %p416, %p417
    %p419 = pneg %p418
    // Predicated region
    $region9: #{tpu_custom_call.1} parent=5 // pred_check
      _
    $region10: #{tpu_custom_call.1} parent=5 // pred_check_branch
      %421 = sbr.rel (%p418) target = $region12
    $region11: #{tpu_custom_call.1} parent=5 // pred_region
      %s422 = ssub.s32 %s22, 1
      // Predicated region
      $region13: #{tpu_custom_call.1} parent=11 // pred_check
        %p423 = pneg %p86
      $region14: #{tpu_custom_call.1} parent=11 // pred_check_branch
        %425 = sbr.rel (%p423) target = $region16
      $region15: #{tpu_custom_call.1} parent=11 // pred_region
        %s426 = smul.u32 16, %s32
        %p427 = scmp.lt.s32.totalorder %s426, 15
        %s428 = scalar_select %p427, %s426, 15
        %s429 = smul.addr %s428, 8
        %s430 = scalar_lea.vmem %s1, %s429
        %s431 = smul.u32 16, %s32
      $region16: #{tpu_custom_call.1} parent=11 // pred_fallthru
        _
      // Predicated region
      $region17: #{tpu_custom_call.1} parent=11 // pred_check
        %p432 = pneg %p107
      $region18: #{tpu_custom_call.1} parent=11 // pred_check_branch
        %434 = sbr.rel (%p432) target = $region20
      $region19: #{tpu_custom_call.1} parent=11 // pred_region
        _
      $region20: #{tpu_custom_call.1} parent=11 // pred_fallthru
        _
      // Predicated region
      $region21: #{tpu_custom_call.1} parent=11 // pred_check
        %p435 = pneg %p128
      $region22: #{tpu_custom_call.1} parent=11 // pred_check_branch
        %437 = sbr.rel (%p435) target = $region24
      $region23: #{tpu_custom_call.1} parent=11 // pred_region
        _
      $region24: #{tpu_custom_call.1} parent=11 // pred_fallthru
        _
      // Predicated region
      $region25: #{tpu_custom_call.1} parent=11 // pred_check
        %p438 = pneg %p149
      $region26: #{tpu_custom_call.1} parent=11 // pred_check_branch
        %440 = sbr.rel (%p438) target = $region28
      $region27: #{tpu_custom_call.1} parent=11 // pred_region
        _
      $region28: #{tpu_custom_call.1} parent=11 // pred_fallthru
        _
      // Predicated region
      $region29: #{tpu_custom_call.1} parent=11 // pred_check
        %p441 = pneg %p170
      $region30: #{tpu_custom_call.1} parent=11 // pred_check_branch
        %443 = sbr.rel (%p441) target = $region32
      $region31: #{tpu_custom_call.1} parent=11 // pred_region
        _
      $region32: #{tpu_custom_call.1} parent=11 // pred_fallthru
        _
      // Predicated region
      $region33: #{tpu_custom_call.1} parent=11 // pred_check
        %p444 = pneg %p191
      $region34: #{tpu_custom_call.1} parent=11 // pred_check_branch
        %446 = sbr.rel (%p444) target = $region36
      $region35: #{tpu_custom_call.1} parent=11 // pred_region
        _
      $region36: #{tpu_custom_call.1} parent=11 // pred_fallthru
        _
      // Predicated region
      $region37: #{tpu_custom_call.1} parent=11 // pred_check
        %p447 = pneg %p212
      $region38: #{tpu_custom_call.1} parent=11 // pred_check_branch
        %449 = sbr.rel (%p447) target = $region40
      $region39: #{tpu_custom_call.1} parent=11 // pred_region
        _
      $region40: #{tpu_custom_call.1} parent=11 // pred_fallthru
        _
      // Predicated region
      $region41: #{tpu_custom_call.1} parent=11 // pred_check
        %p450 = pneg %p233
      $region42: #{tpu_custom_call.1} parent=11 // pred_check_branch
        %452 = sbr.rel (%p450) target = $region44
      $region43: #{tpu_custom_call.1} parent=11 // pred_region
        _
      $region44: #{tpu_custom_call.1} parent=11 // pred_fallthru
        _
      // Predicated region
      $region45: #{tpu_custom_call.1} parent=11 // pred_check
        %p453 = pneg %p254
      $region46: #{tpu_custom_call.1} parent=11 // pred_check_branch
        %455 = sbr.rel (%p453) target = $region48
      $region47: #{tpu_custom_call.1} parent=11 // pred_region
        _
      $region48: #{tpu_custom_call.1} parent=11 // pred_fallthru
        _
      // Predicated region
      $region49: #{tpu_custom_call.1} parent=11 // pred_check
        %p456 = pneg %p275
      $region50: #{tpu_custom_call.1} parent=11 // pred_check_branch
        %458 = sbr.rel (%p456) target = $region52
      $region51: #{tpu_custom_call.1} parent=11 // pred_region
        _
      $region52: #{tpu_custom_call.1} parent=11 // pred_fallthru
        _
      // Predicated region
      $region53: #{tpu_custom_call.1} parent=11 // pred_check
        %p459 = pneg %p296
      $region54: #{tpu_custom_call.1} parent=11 // pred_check_branch
        %461 = sbr.rel (%p459) target = $region56
      $region55: #{tpu_custom_call.1} parent=11 // pred_region
        _
      $region56: #{tpu_custom_call.1} parent=11 // pred_fallthru
        _
      // Predicated region
      $region57: #{tpu_custom_call.1} parent=11 // pred_check
        %p462 = pneg %p317
      $region58: #{tpu_custom_call.1} parent=11 // pred_check_branch
        %464 = sbr.rel (%p462) target = $region60
      $region59: #{tpu_custom_call.1} parent=11 // pred_region
        _
      $region60: #{tpu_custom_call.1} parent=11 // pred_fallthru
        _
      // Predicated region
      $region61: #{tpu_custom_call.1} parent=11 // pred_check
        %p465 = pneg %p338
      $region62: #{tpu_custom_call.1} parent=11 // pred_check_branch
        %467 = sbr.rel (%p465) target = $region64
      $region63: #{tpu_custom_call.1} parent=11 // pred_region
        _
      $region64: #{tpu_custom_call.1} parent=11 // pred_fallthru
        _
      // Predicated region
      $region65: #{tpu_custom_call.1} parent=11 // pred_check
        %p468 = pneg %p359
      $region66: #{tpu_custom_call.1} parent=11 // pred_check_branch
        %470 = sbr.rel (%p468) target = $region68
      $region67: #{tpu_custom_call.1} parent=11 // pred_region
        _
      $region68: #{tpu_custom_call.1} parent=11 // pred_fallthru
        _
      // Predicated region
      $region69: #{tpu_custom_call.1} parent=11 // pred_check
        %p471 = pneg %p380
      $region70: #{tpu_custom_call.1} parent=11 // pred_check_branch
        %473 = sbr.rel (%p471) target = $region72
      $region71: #{tpu_custom_call.1} parent=11 // pred_region
        _
      $region72: #{tpu_custom_call.1} parent=11 // pred_fallthru
        _
    $region12: #{tpu_custom_call.1} parent=5 // pred_fallthru
      _
    %p474 = scmp.lt.s32.totalorder %s22, 2
    // Predicated region
    $region73: #{tpu_custom_call.1} parent=5 // pred_check
      %p475 = pneg %p474
    $region74: #{tpu_custom_call.1} parent=5 // pred_check_branch
      %477 = sbr.rel (%p475) target = $region76
    $region75: #{tpu_custom_call.1} parent=5 // pred_region
      // Predicated region
      $region77: #{tpu_custom_call.1} parent=75 // pred_check
        %p478 = pneg %p54
      $region78: #{tpu_custom_call.1} parent=75 // pred_check_branch
        %480 = sbr.rel (%p478) target = $region80
      $region79: #{tpu_custom_call.1} parent=75 // pred_region
        %p481 = scmp.lt.s32.totalorder %s29, 1
        %s482 = scalar_select %p481, %s29, 1
        %s483 = scalar_lea.vmem %s0, %s482
      $region80: #{tpu_custom_call.1} parent=75 // pred_fallthru
        _
    $region76: #{tpu_custom_call.1} parent=5 // pred_fallthru
      _
    %p484 = scmp.le.s32.totalorder 1, %s22
    %p485 = scmp.lt.s32.totalorder %s22, 3
    %p486 = pnand %p484, %p485
    %p487 = pneg %p486
    // Predicated region
    $region81: #{tpu_custom_call.1} parent=5 // pred_check
      _
    $region82: #{tpu_custom_call.1} parent=5 // pred_check_branch
      %489 = sbr.rel (%p486) target = $region84
    $region83: #{tpu_custom_call.1} parent=5 // pred_region
      %s490 = ssub.s32 %s22, 1
      %p491 = scmp.lt.s32.totalorder %s31, 1
      %s492 = scalar_select %p491, %s31, 1
      %s493 = scalar_lea.vmem %s0, %s492
      %p494 = pneg %p60
      %p495 = pneg %p57
      %s496 = smul.u32 16, %s32
      %p497 = scmp.lt.s32.totalorder %s496, 15
      %s498 = scalar_select %p497, %s496, 15
      %s499 = smul.addr %s498, 8
      %s500 = scalar_lea.vmem %s1, %s499
      %p501 = pneg %p86
      %p502 = pneg %p83
      %p503 = pneg %p107
      %p504 = pneg %p104
      %p505 = pneg %p128
      %p506 = pneg %p125
      %p507 = pneg %p149
      %p508 = pneg %p146
      %p509 = pneg %p170
      %p510 = pneg %p167
      %p511 = pneg %p191
      %p512 = pneg %p188
      %p513 = pneg %p212
      %p514 = pneg %p209
      %p515 = pneg %p233
      %p516 = pneg %p230
      %p517 = pneg %p254
      %p518 = pneg %p251
      %p519 = pneg %p275
      %p520 = pneg %p272
      %p521 = pneg %p296
      %p522 = pneg %p293
      %p523 = pneg %p317
      %p524 = pneg %p314
      %p525 = pneg %p338
      %p526 = pneg %p335
      %p527 = pneg %p359
      %p528 = pneg %p356
      %p529 = pneg %p380
      %p530 = pneg %p377
      %p531 = pneg %p408
      %p532 = pneg %p405
      %s533 = smul.u32 16, %s32
      %p534 = scmp.lt.s32.totalorder %s31, 1
      %s535 = scalar_select %p534, %s31, 1
      %p536 = scmp.lt.s32.totalorder %s533, 15
      %s537 = scalar_select %p536, %s533, 15
      %s538 = smul.addr %s535, 16
      %s539 = sadd.s32 %s537, %s538
      %s540 = smul.addr %s539, 8
      %s541 = scalar_lea.vmem %s16, %s540
      %p542 = scmp.lt.s32.totalorder %s31, 1
      %s543 = scalar_select %p542, %s31, 1
      %s544 = scalar_lea.vmem %s0, %s543
      %s545 = smul.u32 16, %s32
      %p546 = scmp.lt.s32.totalorder %s545, 15
      %s547 = scalar_select %p546, %s545, 15
      %s548 = smul.addr %s547, 8
      %s549 = scalar_lea.vmem %s1, %s548
      %s550 = smul.u32 16, %s32
      %s551 = smul.u32 16, %s32
      %p552 = scmp.lt.s32.totalorder %s31, 1
      %s553 = scalar_select %p552, %s31, 1
      %p554 = scmp.lt.s32.totalorder %s551, 15
      %s555 = scalar_select %p554, %s551, 15
      %s556 = smul.addr %s553, 16
      %s557 = sadd.s32 %s555, %s556
      %s558 = smul.addr %s557, 8
      %s559 = scalar_lea.vmem %s16, %s558
      %s560 = smul.u32 16, %s32
      %v561 = vld [vmem:[%s544] sm:$0x1]
      %v562 = vld [vmem:[%s549] sm:$0xff]
      %v563 = vld [vmem:[%s549 + $0x8] sm:$0xff]
      %v564 = vld [vmem:[%s549 + $0x10] sm:$0xff]
      %v565 = vld [vmem:[%s549 + $0x18] sm:$0xff]
      %v566 = vld [vmem:[%s549 + $0x20] sm:$0xff]
      %v567 = vld [vmem:[%s549 + $0x28] sm:$0xff]
      %v568 = vld [vmem:[%s549 + $0x30] sm:$0xff]
      %v569 = vld [vmem:[%s549 + $0x38] sm:$0xff]
      %v570 = vld [vmem:[%s549 + $0x40] sm:$0xff]
      %v571 = vld [vmem:[%s549 + $0x48] sm:$0xff]
      %v572 = vld [vmem:[%s549 + $0x50] sm:$0xff]
      %v573 = vld [vmem:[%s549 + $0x58] sm:$0xff]
      %v574 = vld [vmem:[%s549 + $0x60] sm:$0xff]
      %v575 = vld [vmem:[%s549 + $0x68] sm:$0xff]
      %v576 = vld [vmem:[%s549 + $0x70] sm:$0xff]
      %v577 = vld [vmem:[%s549 + $0x78] sm:$0xff]
      %v578 = vld [vmem:[%s2] sm:$0x3]
      %v579 = vld [vmem:[%s3] sm:$0xff]
      %v580 = vld [vmem:[%s3 + $0x8] sm:$0xff]
      %v581 = vld [vmem:[%s3 + $0x10] sm:$0xff]
      %v582 = vld [vmem:[%s3 + $0x18] sm:$0xff]
      %v583 = vld [vmem:[%s4] sm:$0x1]
      %vm584 = vcmask 261120
      %v586 = vsel %vm584, %v561, 0
      %588 = vmatprep.subr.mxu0 0.0
      %589 = vmatpush1.msra.mxu0 0.0
      %590 = vmatprep.subr.mxu0 0.0
      %591 = vmatpush1.msra.mxu0 0.0
      %592 = vmatprep.subr.mxu0 0.0
      %593 = vmatpush1.msra.mxu0 0.0
      %594 = vmatprep.subr.mxu0 0.0
      %595 = vmatpush1.msra.mxu0 0.0
      %596 = vmatprep.subr.mxu0 0.0
      %597 = vmatpush1.msra.mxu0 0.0
      %598 = vmatprep.subr.mxu0 0.0
      %599 = vmatpush1.msra.mxu0 0.0
      %600 = vmatprep.subr.mxu0 0.0
      %601 = vmatpush1.msra.mxu0 0.0
      %602 = vmatprep.subr.mxu0 0.0
      %603 = vmatpush1.msra.mxu0 0.0
      %604 = vmatprep.subr.mxu0 0.0
      %605 = vmatpush1.msra.mxu0 0.0
      %606 = vmatprep.subr.mxu0 0.0
      %607 = vmatpush1.msra.mxu0 0.0
      %608 = vmatprep.subr.mxu0 0.0
      %609 = vmatpush1.msra.mxu0 0.0
      %610 = vmatprep.subr.mxu0 0.0
      %611 = vmatpush1.msra.mxu0 0.0
      %612 = vmatprep.subr.mxu0 0.0
      %613 = vmatpush1.msra.mxu0 %v582
      %614 = vmatprep.subr.mxu0 0.0
      %615 = vmatpush1.msra.mxu0 %v581
      %616 = vmatprep.subr.mxu0 0.0
      %617 = vmatpush1.msra.mxu0 %v580
      %618 = vmatprep.subr.mxu0 0.0
      %619 = vmatpush1.msra.mxu0 %v579
      %620 = vmatprep.subr.mxu0 0.0
      %621 = vmatpush2.msra.mxu0 0.0
      %622 = vmatprep.subr.mxu0 0.0
      %623 = vmatpush2.msra.mxu0 0.0
      %624 = vmatprep.subr.mxu0 0.0
      %625 = vmatpush2.msra.mxu0 0.0
      %626 = vmatprep.subr.mxu0 0.0
      %627 = vmatpush2.msra.mxu0 0.0
      %628 = vmatprep.subr.mxu0 0.0
      %629 = vmatpush2.msra.mxu0 0.0
      %630 = vmatprep.subr.mxu0 0.0
      %631 = vmatpush2.msra.mxu0 0.0
      %632 = vmatprep.subr.mxu0 0.0
      %633 = vmatpush2.msra.mxu0 0.0
      %634 = vmatprep.subr.mxu0 0.0
      %635 = vmatpush2.msra.mxu0 0.0
      %636 = vmatprep.subr.mxu0 0.0
      %637 = vmatpush2.msra.mxu0 0.0
      %638 = vmatprep.subr.mxu0 0.0
      %639 = vmatpush2.msra.mxu0 0.0
      %640 = vmatprep.subr.mxu0 0.0
      %641 = vmatpush2.msra.mxu0 0.0
      %642 = vmatprep.subr.mxu0 0.0
      %643 = vmatpush2.msra.mxu0 0.0
      %644 = vmatprep.subr.mxu0 0.0
      %645 = vmatpush2.msra.mxu0 0.0
      %646 = vmatprep.subr.mxu0 0.0
      %647 = vmatpush2.msra.mxu0 0.0
      %648 = vmatprep.subr.mxu0 0.0
      %649 = vmatpush2.msra.mxu0 0.0
      %650 = vmatprep.subr.mxu0 0.0
      %651 = vmatpush2.msra.mxu0 0.0
      %652 = vmatprep.mubr.f32.mxu0 0.0
      %653 = vmatmul.mubr.f32.gmra.mxu0 %v586
      %v654 = vpop.f32.mrf.mxu0
      %v655 = vadd.f32 0.0, %v654
      %v656 = vpop.f32.mrf.mxu0
      %657 = vdwg.mxu0
      %v658 = vlaneseq
      %v659 = vshrl.u32 %v658, 7
      %v660 = vsub.s32 0, %v659
      %v661 = vrot.slane %v655, %v660
      %vm662 = vcmask 15360
      %v664 = vsel %vm662, %v562, 0
      %v667 = vsel %vm662, %v563, 0
      %v670 = vsel %vm662, %v564, 0
      %v673 = vsel %vm662, %v565, 0
      %v676 = vsel %vm662, %v566, 0
      %v679 = vsel %vm662, %v567, 0
      %v682 = vsel %vm662, %v568, 0
      %v685 = vsel %vm662, %v569, 0
      %v688 = vsel %vm662, %v570, 0
      %v691 = vsel %vm662, %v571, 0
      %v694 = vsel %vm662, %v572, 0
      %v697 = vsel %vm662, %v573, 0
      %v700 = vsel %vm662, %v574, 0
      %v703 = vsel %vm662, %v575, 0
      %v706 = vsel %vm662, %v576, 0
      %v709 = vsel %vm662, %v577, 0
      %vm711 = vcmask 1041408
      %v713 = vsel %vm711, %v578, 0
      %715 = vmatprep.subr.mxu0 0.0
      %716 = vmatpush1.msra.mxu0 0.0
      %717 = vmatprep.subr.mxu0 0.0
      %718 = vmatpush1.msra.mxu0 0.0
      %719 = vmatprep.subr.mxu0 0.0
      %720 = vmatpush1.msra.mxu0 0.0
      %721 = vmatprep.subr.mxu0 0.0
      %722 = vmatpush1.msra.mxu0 0.0
      %723 = vmatprep.subr.mxu0 0.0
      %724 = vmatpush1.msra.mxu0 0.0
      %725 = vmatprep.subr.mxu0 0.0
      %726 = vmatpush1.msra.mxu0 0.0
      %727 = vmatprep.subr.mxu0 0.0
      %728 = vmatpush1.msra.mxu0 0.0
      %729 = vmatprep.subr.mxu0 0.0
      %730 = vmatpush1.msra.mxu0 0.0
      %731 = vmatprep.subr.mxu0 0.0
      %732 = vmatpush1.msra.mxu0 0.0
      %733 = vmatprep.subr.mxu0 0.0
      %734 = vmatpush1.msra.mxu0 0.0
      %735 = vmatprep.subr.mxu0 0.0
      %736 = vmatpush1.msra.mxu0 0.0
      %737 = vmatprep.subr.mxu0 0.0
      %738 = vmatpush1.msra.mxu0 0.0
      %739 = vmatprep.subr.mxu0 0.0
      %740 = vmatpush1.msra.mxu0 0.0
      %741 = vmatprep.subr.mxu0 0.0
      %742 = vmatpush1.msra.mxu0 0.0
      %743 = vmatprep.subr.mxu0 0.0
      %744 = vmatpush1.msra.mxu0 0.0
      %745 = vmatprep.subr.mxu0 0.0
      %746 = vmatpush1.msra.mxu0 %v713
      %747 = vmatprep.subr.mxu0 0.0
      %748 = vmatpush2.msra.mxu0 0.0
      %749 = vmatprep.subr.mxu0 0.0
      %750 = vmatpush2.msra.mxu0 0.0
      %751 = vmatprep.subr.mxu0 0.0
      %752 = vmatpush2.msra.mxu0 0.0
      %753 = vmatprep.subr.mxu0 0.0
      %754 = vmatpush2.msra.mxu0 0.0
      %755 = vmatprep.subr.mxu0 0.0
      %756 = vmatpush2.msra.mxu0 0.0
      %757 = vmatprep.subr.mxu0 0.0
      %758 = vmatpush2.msra.mxu0 0.0
      %759 = vmatprep.subr.mxu0 0.0
      %760 = vmatpush2.msra.mxu0 0.0
      %761 = vmatprep.subr.mxu0 0.0
      %762 = vmatpush2.msra.mxu0 0.0
      %763 = vmatprep.subr.mxu0 0.0
      %764 = vmatpush2.msra.mxu0 0.0
      %765 = vmatprep.subr.mxu0 0.0
      %766 = vmatpush2.msra.mxu0 0.0
      %767 = vmatprep.subr.mxu0 0.0
      %768 = vmatpush2.msra.mxu0 0.0
      %769 = vmatprep.subr.mxu0 0.0
      %770 = vmatpush2.msra.mxu0 0.0
      %771 = vmatprep.subr.mxu0 0.0
      %772 = vmatpush2.msra.mxu0 0.0
      %773 = vmatprep.subr.mxu0 0.0
      %774 = vmatpush2.msra.mxu0 0.0
      %775 = vmatprep.subr.mxu0 0.0
      %776 = vmatpush2.msra.mxu0 0.0
      %777 = vmatprep.subr.mxu0 0.0
      %778 = vmatpush2.msra.mxu0 0.0
      %779 = vmatprep.mubr.f32.mxu0 0.0
      %780 = vmatmul.mubr.f32.gmra.mxu0 %v664
      %v781 = vpop.f32.mrf.mxu0
      %v782 = vadd.f32 %v661, %v781
      %v783 = vpop.f32.mrf.mxu0
      %784 = vmatprep.mubr.f32.mxu0 0.0
      %785 = vmatmul.mubr.f32.gmra.mxu0 %v667
      %v786 = vpop.f32.mrf.mxu0
      %v787 = vadd.f32 %v661, %v786
      %v788 = vpop.f32.mrf.mxu0
      %789 = vmatprep.mubr.f32.mxu0 0.0
      %790 = vmatmul.mubr.f32.gmra.mxu0 %v670
      %v791 = vpop.f32.mrf.mxu0
      %v792 = vadd.f32 %v661, %v791
      %v793 = vpop.f32.mrf.mxu0
      %794 = vmatprep.mubr.f32.mxu0 0.0
      %795 = vmatmul.mubr.f32.gmra.mxu0 %v673
      %v796 = vpop.f32.mrf.mxu0
      %v797 = vadd.f32 %v661, %v796
      %v798 = vpop.f32.mrf.mxu0
      %799 = vmatprep.mubr.f32.mxu0 0.0
      %800 = vmatmul.mubr.f32.gmra.mxu0 %v676
      %v801 = vpop.f32.mrf.mxu0
      %v802 = vadd.f32 %v661, %v801
      %v803 = vpop.f32.mrf.mxu0
      %804 = vmatprep.mubr.f32.mxu0 0.0
      %805 = vmatmul.mubr.f32.gmra.mxu0 %v679
      %v806 = vpop.f32.mrf.mxu0
      %v807 = vadd.f32 %v661, %v806
      %v808 = vpop.f32.mrf.mxu0
      %809 = vmatprep.mubr.f32.mxu0 0.0
      %810 = vmatmul.mubr.f32.gmra.mxu0 %v682
      %v811 = vpop.f32.mrf.mxu0
      %v812 = vadd.f32 %v661, %v811
      %v813 = vpop.f32.mrf.mxu0
      %814 = vmatprep.mubr.f32.mxu0 0.0
      %815 = vmatmul.mubr.f32.gmra.mxu0 %v685
      %v816 = vpop.f32.mrf.mxu0
      %v817 = vadd.f32 %v661, %v816
      %v818 = vpop.f32.mrf.mxu0
      %819 = vmatprep.mubr.f32.mxu0 0.0
      %820 = vmatmul.mubr.f32.gmra.mxu0 %v688
      %v821 = vpop.f32.mrf.mxu0
      %v822 = vadd.f32 %v661, %v821
      %v823 = vpop.f32.mrf.mxu0
      %824 = vmatprep.mubr.f32.mxu0 0.0
      %825 = vmatmul.mubr.f32.gmra.mxu0 %v691
      %v826 = vpop.f32.mrf.mxu0
      %v827 = vadd.f32 %v661, %v826
      %v828 = vpop.f32.mrf.mxu0
      %829 = vmatprep.mubr.f32.mxu0 0.0
      %830 = vmatmul.mubr.f32.gmra.mxu0 %v694
      %v831 = vpop.f32.mrf.mxu0
      %v832 = vadd.f32 %v661, %v831
      %v833 = vpop.f32.mrf.mxu0
      %834 = vmatprep.mubr.f32.mxu0 0.0
      %835 = vmatmul.mubr.f32.gmra.mxu0 %v697
      %v836 = vpop.f32.mrf.mxu0
      %v837 = vadd.f32 %v661, %v836
      %v838 = vpop.f32.mrf.mxu0
      %839 = vmatprep.mubr.f32.mxu0 0.0
      %840 = vmatmul.mubr.f32.gmra.mxu0 %v700
      %v841 = vpop.f32.mrf.mxu0
      %v842 = vadd.f32 %v661, %v841
      %v843 = vpop.f32.mrf.mxu0
      %844 = vmatprep.mubr.f32.mxu0 0.0
      %845 = vmatmul.mubr.f32.gmra.mxu0 %v703
      %v846 = vpop.f32.mrf.mxu0
      %v847 = vadd.f32 %v661, %v846
      %v848 = vpop.f32.mrf.mxu0
      %849 = vmatprep.mubr.f32.mxu0 0.0
      %850 = vmatmul.mubr.f32.gmra.mxu0 %v706
      %v851 = vpop.f32.mrf.mxu0
      %v852 = vadd.f32 %v661, %v851
      %v853 = vpop.f32.mrf.mxu0
      %854 = vmatprep.mubr.f32.mxu0 0.0
      %855 = vmatmul.mubr.f32.gmra.mxu0 %v709
      %v856 = vpop.f32.mrf.mxu0
      %v857 = vadd.f32 %v661, %v856
      %v858 = vpop.f32.mrf.mxu0
      %859 = vdwg.mxu0
      %v861 = vlaneseq
      %v862 = vshrl.u32 %v861, 7
      %v863 = vsub.s32 0, %v862
      %v864 = vrot.slane %v583, %v863
      %v866 = vadd.f32 %v782, %v864
      %v867 = vadd.f32 %v787, %v864
      %v868 = vadd.f32 %v792, %v864
      %v869 = vadd.f32 %v797, %v864
      %v870 = vadd.f32 %v802, %v864
      %v871 = vadd.f32 %v807, %v864
      %v872 = vadd.f32 %v812, %v864
      %v873 = vadd.f32 %v817, %v864
      %v874 = vadd.f32 %v822, %v864
      %v875 = vadd.f32 %v827, %v864
      %v876 = vadd.f32 %v832, %v864
      %v877 = vadd.f32 %v837, %v864
      %v878 = vadd.f32 %v842, %v864
      %v879 = vadd.f32 %v847, %v864
      %v880 = vadd.f32 %v852, %v864
      %v881 = vadd.f32 %v857, %v864
      %v882 = vmax.f32 %v866, 0.0
      %v883 = vmax.f32 %v867, 0.0
      %v884 = vmax.f32 %v868, 0.0
      %v885 = vmax.f32 %v869, 0.0
      %v886 = vmax.f32 %v870, 0.0
      %v887 = vmax.f32 %v871, 0.0
      %v888 = vmax.f32 %v872, 0.0
      %v889 = vmax.f32 %v873, 0.0
      %v890 = vmax.f32 %v874, 0.0
      %v891 = vmax.f32 %v875, 0.0
      %v892 = vmax.f32 %v876, 0.0
      %v893 = vmax.f32 %v877, 0.0
      %v894 = vmax.f32 %v878, 0.0
      %v895 = vmax.f32 %v879, 0.0
      %v896 = vmax.f32 %v880, 0.0
      %v897 = vmax.f32 %v881, 0.0
      %v898 = vld [vmem:[%s5] sm:$0xff]
      %v899 = vld [vmem:[%s5 + $0x8] sm:$0xff]
      %v900 = vld [vmem:[%s5 + $0x10] sm:$0xff]
      %v901 = vld [vmem:[%s5 + $0x18] sm:$0xff]
      %v902 = vld [vmem:[%s6] sm:$0x1]
      %v904 = vlaneseq
      %v905 = vshrl.u32 %v904, 7
      %v906 = vsub.s32 0, %v905
      %v907 = vrot.slane %v902, %v906
      %v910 = vsel %vm584, %v882, 0
      %v913 = vsel %vm584, %v883, 0
      %v916 = vsel %vm584, %v884, 0
      %v919 = vsel %vm584, %v885, 0
      %v922 = vsel %vm584, %v886, 0
      %v925 = vsel %vm584, %v887, 0
      %v928 = vsel %vm584, %v888, 0
      %v931 = vsel %vm584, %v889, 0
      %v934 = vsel %vm584, %v890, 0
      %v937 = vsel %vm584, %v891, 0
      %v940 = vsel %vm584, %v892, 0
      %v943 = vsel %vm584, %v893, 0
      %v946 = vsel %vm584, %v894, 0
      %v949 = vsel %vm584, %v895, 0
      %v952 = vsel %vm584, %v896, 0
      %v955 = vsel %vm584, %v897, 0
      %957 = vmatprep.subr.mxu0 0.0
      %958 = vmatpush1.msra.mxu0 0.0
      %959 = vmatprep.subr.mxu0 0.0
      %960 = vmatpush1.msra.mxu0 0.0
      %961 = vmatprep.subr.mxu0 0.0
      %962 = vmatpush1.msra.mxu0 0.0
      %963 = vmatprep.subr.mxu0 0.0
      %964 = vmatpush1.msra.mxu0 0.0
      %965 = vmatprep.subr.mxu0 0.0
      %966 = vmatpush1.msra.mxu0 0.0
      %967 = vmatprep.subr.mxu0 0.0
      %968 = vmatpush1.msra.mxu0 0.0
      %969 = vmatprep.subr.mxu0 0.0
      %970 = vmatpush1.msra.mxu0 0.0
      %971 = vmatprep.subr.mxu0 0.0
      %972 = vmatpush1.msra.mxu0 0.0
      %973 = vmatprep.subr.mxu0 0.0
      %974 = vmatpush1.msra.mxu0 0.0
      %975 = vmatprep.subr.mxu0 0.0
      %976 = vmatpush1.msra.mxu0 0.0
      %977 = vmatprep.subr.mxu0 0.0
      %978 = vmatpush1.msra.mxu0 0.0
      %979 = vmatprep.subr.mxu0 0.0
      %980 = vmatpush1.msra.mxu0 0.0
      %981 = vmatprep.subr.mxu0 0.0
      %982 = vmatpush1.msra.mxu0 %v901
      %983 = vmatprep.subr.mxu0 0.0
      %984 = vmatpush1.msra.mxu0 %v900
      %985 = vmatprep.subr.mxu0 0.0
      %986 = vmatpush1.msra.mxu0 %v899
      %987 = vmatprep.subr.mxu0 0.0
      %988 = vmatpush1.msra.mxu0 %v898
      %989 = vmatprep.subr.mxu0 0.0
      %990 = vmatpush2.msra.mxu0 0.0
      %991 = vmatprep.subr.mxu0 0.0
      %992 = vmatpush2.msra.mxu0 0.0
      %993 = vmatprep.subr.mxu0 0.0
      %994 = vmatpush2.msra.mxu0 0.0
      %995 = vmatprep.subr.mxu0 0.0
      %996 = vmatpush2.msra.mxu0 0.0
      %997 = vmatprep.subr.mxu0 0.0
      %998 = vmatpush2.msra.mxu0 0.0
      %999 = vmatprep.subr.mxu0 0.0
      %1000 = vmatpush2.msra.mxu0 0.0
      %1001 = vmatprep.subr.mxu0 0.0
      %1002 = vmatpush2.msra.mxu0 0.0
      %1003 = vmatprep.subr.mxu0 0.0
      %1004 = vmatpush2.msra.mxu0 0.0
      %1005 = vmatprep.subr.mxu0 0.0
      %1006 = vmatpush2.msra.mxu0 0.0
      %1007 = vmatprep.subr.mxu0 0.0
      %1008 = vmatpush2.msra.mxu0 0.0
      %1009 = vmatprep.subr.mxu0 0.0
      %1010 = vmatpush2.msra.mxu0 0.0
      %1011 = vmatprep.subr.mxu0 0.0
      %1012 = vmatpush2.msra.mxu0 0.0
      %1013 = vmatprep.subr.mxu0 0.0
      %1014 = vmatpush2.msra.mxu0 0.0
      %1015 = vmatprep.subr.mxu0 0.0
      %1016 = vmatpush2.msra.mxu0 0.0
      %1017 = vmatprep.subr.mxu0 0.0
      %1018 = vmatpush2.msra.mxu0 0.0
      %1019 = vmatprep.subr.mxu0 0.0
      %1020 = vmatpush2.msra.mxu0 0.0
      %1021 = vmatprep.mubr.f32.mxu0 0.0
      %1022 = vmatmul.mubr.f32.gmra.mxu0 %v910
      %v1023 = vpop.f32.mrf.mxu0
      %v1024 = vadd.f32 %v907, %v1023
      %v1025 = vpop.f32.mrf.mxu0
      %1026 = vmatprep.mubr.f32.mxu0 0.0
      %1027 = vmatmul.mubr.f32.gmra.mxu0 %v913
      %v1028 = vpop.f32.mrf.mxu0
      %v1029 = vadd.f32 %v907, %v1028
      %v1030 = vpop.f32.mrf.mxu0
      %1031 = vmatprep.mubr.f32.mxu0 0.0
      %1032 = vmatmul.mubr.f32.gmra.mxu0 %v916
      %v1033 = vpop.f32.mrf.mxu0
      %v1034 = vadd.f32 %v907, %v1033
      %v1035 = vpop.f32.mrf.mxu0
      %1036 = vmatprep.mubr.f32.mxu0 0.0
      %1037 = vmatmul.mubr.f32.gmra.mxu0 %v919
      %v1038 = vpop.f32.mrf.mxu0
      %v1039 = vadd.f32 %v907, %v1038
      %v1040 = vpop.f32.mrf.mxu0
      %1041 = vmatprep.mubr.f32.mxu0 0.0
      %1042 = vmatmul.mubr.f32.gmra.mxu0 %v922
      %v1043 = vpop.f32.mrf.mxu0
      %v1044 = vadd.f32 %v907, %v1043
      %v1045 = vpop.f32.mrf.mxu0
      %1046 = vmatprep.mubr.f32.mxu0 0.0
      %1047 = vmatmul.mubr.f32.gmra.mxu0 %v925
      %v1048 = vpop.f32.mrf.mxu0
      %v1049 = vadd.f32 %v907, %v1048
      %v1050 = vpop.f32.mrf.mxu0
      %1051 = vmatprep.mubr.f32.mxu0 0.0
      %1052 = vmatmul.mubr.f32.gmra.mxu0 %v928
      %v1053 = vpop.f32.mrf.mxu0
      %v1054 = vadd.f32 %v907, %v1053
      %v1055 = vpop.f32.mrf.mxu0
      %1056 = vmatprep.mubr.f32.mxu0 0.0
      %1057 = vmatmul.mubr.f32.gmra.mxu0 %v931
      %v1058 = vpop.f32.mrf.mxu0
      %v1059 = vadd.f32 %v907, %v1058
      %v1060 = vpop.f32.mrf.mxu0
      %1061 = vmatprep.mubr.f32.mxu0 0.0
      %1062 = vmatmul.mubr.f32.gmra.mxu0 %v934
      %v1063 = vpop.f32.mrf.mxu0
      %v1064 = vadd.f32 %v907, %v1063
      %v1065 = vpop.f32.mrf.mxu0
      %1066 = vmatprep.mubr.f32.mxu0 0.0
      %1067 = vmatmul.mubr.f32.gmra.mxu0 %v937
      %v1068 = vpop.f32.mrf.mxu0
      %v1069 = vadd.f32 %v907, %v1068
      %v1070 = vpop.f32.mrf.mxu0
      %1071 = vmatprep.mubr.f32.mxu0 0.0
      %1072 = vmatmul.mubr.f32.gmra.mxu0 %v940
      %v1073 = vpop.f32.mrf.mxu0
      %v1074 = vadd.f32 %v907, %v1073
      %v1075 = vpop.f32.mrf.mxu0
      %1076 = vmatprep.mubr.f32.mxu0 0.0
      %1077 = vmatmul.mubr.f32.gmra.mxu0 %v943
      %v1078 = vpop.f32.mrf.mxu0
      %v1079 = vadd.f32 %v907, %v1078
      %v1080 = vpop.f32.mrf.mxu0
      %1081 = vmatprep.mubr.f32.mxu0 0.0
      %1082 = vmatmul.mubr.f32.gmra.mxu0 %v946
      %v1083 = vpop.f32.mrf.mxu0
      %v1084 = vadd.f32 %v907, %v1083
      %v1085 = vpop.f32.mrf.mxu0
      %1086 = vmatprep.mubr.f32.mxu0 0.0
      %1087 = vmatmul.mubr.f32.gmra.mxu0 %v949
      %v1088 = vpop.f32.mrf.mxu0
      %v1089 = vadd.f32 %v907, %v1088
      %v1090 = vpop.f32.mrf.mxu0
      %1091 = vmatprep.mubr.f32.mxu0 0.0
      %1092 = vmatmul.mubr.f32.gmra.mxu0 %v952
      %v1093 = vpop.f32.mrf.mxu0
      %v1094 = vadd.f32 %v907, %v1093
      %v1095 = vpop.f32.mrf.mxu0
      %1096 = vmatprep.mubr.f32.mxu0 0.0
      %1097 = vmatmul.mubr.f32.gmra.mxu0 %v955
      %v1098 = vpop.f32.mrf.mxu0
      %v1099 = vadd.f32 %v907, %v1098
      %v1100 = vpop.f32.mrf.mxu0
      %1101 = vdwg.mxu0
      %v1102 = vmax.f32 %v1024, 0.0
      %v1103 = vmax.f32 %v1029, 0.0
      %v1104 = vmax.f32 %v1034, 0.0
      %v1105 = vmax.f32 %v1039, 0.0
      %v1106 = vmax.f32 %v1044, 0.0
      %v1107 = vmax.f32 %v1049, 0.0
      %v1108 = vmax.f32 %v1054, 0.0
      %v1109 = vmax.f32 %v1059, 0.0
      %v1110 = vmax.f32 %v1064, 0.0
      %v1111 = vmax.f32 %v1069, 0.0
      %v1112 = vmax.f32 %v1074, 0.0
      %v1113 = vmax.f32 %v1079, 0.0
      %v1114 = vmax.f32 %v1084, 0.0
      %v1115 = vmax.f32 %v1089, 0.0
      %v1116 = vmax.f32 %v1094, 0.0
      %v1117 = vmax.f32 %v1099, 0.0
      %v1118 = vld [vmem:[%s7] sm:$0xff]
      %v1119 = vld [vmem:[%s7 + $0x8] sm:$0xff]
      %v1120 = vld [vmem:[%s7 + $0x10] sm:$0xff]
      %v1121 = vld [vmem:[%s7 + $0x18] sm:$0xff]
      %v1122 = vld [vmem:[%s8] sm:$0x1]
      %v1124 = vlaneseq
      %v1125 = vshrl.u32 %v1124, 7
      %v1126 = vsub.s32 0, %v1125
      %v1127 = vrot.slane %v1122, %v1126
      %v1130 = vsel %vm584, %v1102, 0
      %v1133 = vsel %vm584, %v1103, 0
      %v1136 = vsel %vm584, %v1104, 0
      %v1139 = vsel %vm584, %v1105, 0
      %v1142 = vsel %vm584, %v1106, 0
      %v1145 = vsel %vm584, %v1107, 0
      %v1148 = vsel %vm584, %v1108, 0
      %v1151 = vsel %vm584, %v1109, 0
      %v1154 = vsel %vm584, %v1110, 0
      %v1157 = vsel %vm584, %v1111, 0
      %v1160 = vsel %vm584, %v1112, 0
      %v1163 = vsel %vm584, %v1113, 0
      %v1166 = vsel %vm584, %v1114, 0
      %v1169 = vsel %vm584, %v1115, 0
      %v1172 = vsel %vm584, %v1116, 0
      %v1175 = vsel %vm584, %v1117, 0
      %1177 = vmatprep.subr.mxu0 0.0
      %1178 = vmatpush1.msra.mxu0 0.0
      %1179 = vmatprep.subr.mxu0 0.0
      %1180 = vmatpush1.msra.mxu0 0.0
      %1181 = vmatprep.subr.mxu0 0.0
      %1182 = vmatpush1.msra.mxu0 0.0
      %1183 = vmatprep.subr.mxu0 0.0
      %1184 = vmatpush1.msra.mxu0 0.0
      %1185 = vmatprep.subr.mxu0 0.0
      %1186 = vmatpush1.msra.mxu0 0.0
      %1187 = vmatprep.subr.mxu0 0.0
      %1188 = vmatpush1.msra.mxu0 0.0
      %1189 = vmatprep.subr.mxu0 0.0
      %1190 = vmatpush1.msra.mxu0 0.0
      %1191 = vmatprep.subr.mxu0 0.0
      %1192 = vmatpush1.msra.mxu0 0.0
      %1193 = vmatprep.subr.mxu0 0.0
      %1194 = vmatpush1.msra.mxu0 0.0
      %1195 = vmatprep.subr.mxu0 0.0
      %1196 = vmatpush1.msra.mxu0 0.0
      %1197 = vmatprep.subr.mxu0 0.0
      %1198 = vmatpush1.msra.mxu0 0.0
      %1199 = vmatprep.subr.mxu0 0.0
      %1200 = vmatpush1.msra.mxu0 0.0
      %1201 = vmatprep.subr.mxu0 0.0
      %1202 = vmatpush1.msra.mxu0 %v1121
      %1203 = vmatprep.subr.mxu0 0.0
      %1204 = vmatpush1.msra.mxu0 %v1120
      %1205 = vmatprep.subr.mxu0 0.0
      %1206 = vmatpush1.msra.mxu0 %v1119
      %1207 = vmatprep.subr.mxu0 0.0
      %1208 = vmatpush1.msra.mxu0 %v1118
      %1209 = vmatprep.subr.mxu0 0.0
      %1210 = vmatpush2.msra.mxu0 0.0
      %1211 = vmatprep.subr.mxu0 0.0
      %1212 = vmatpush2.msra.mxu0 0.0
      %1213 = vmatprep.subr.mxu0 0.0
      %1214 = vmatpush2.msra.mxu0 0.0
      %1215 = vmatprep.subr.mxu0 0.0
      %1216 = vmatpush2.msra.mxu0 0.0
      %1217 = vmatprep.subr.mxu0 0.0
      %1218 = vmatpush2.msra.mxu0 0.0
      %1219 = vmatprep.subr.mxu0 0.0
      %1220 = vmatpush2.msra.mxu0 0.0
      %1221 = vmatprep.subr.mxu0 0.0
      %1222 = vmatpush2.msra.mxu0 0.0
      %1223 = vmatprep.subr.mxu0 0.0
      %1224 = vmatpush2.msra.mxu0 0.0
      %1225 = vmatprep.subr.mxu0 0.0
      %1226 = vmatpush2.msra.mxu0 0.0
      %1227 = vmatprep.subr.mxu0 0.0
      %1228 = vmatpush2.msra.mxu0 0.0
      %1229 = vmatprep.subr.mxu0 0.0
      %1230 = vmatpush2.msra.mxu0 0.0
      %1231 = vmatprep.subr.mxu0 0.0
      %1232 = vmatpush2.msra.mxu0 0.0
      %1233 = vmatprep.subr.mxu0 0.0
      %1234 = vmatpush2.msra.mxu0 0.0
      %1235 = vmatprep.subr.mxu0 0.0
      %1236 = vmatpush2.msra.mxu0 0.0
      %1237 = vmatprep.subr.mxu0 0.0
      %1238 = vmatpush2.msra.mxu0 0.0
      %1239 = vmatprep.subr.mxu0 0.0
      %1240 = vmatpush2.msra.mxu0 0.0
      %1241 = vmatprep.mubr.f32.mxu0 0.0
      %1242 = vmatmul.mubr.f32.gmra.mxu0 %v1130
      %v1243 = vpop.f32.mrf.mxu0
      %v1244 = vadd.f32 %v1127, %v1243
      %v1245 = vpop.f32.mrf.mxu0
      %1246 = vmatprep.mubr.f32.mxu0 0.0
      %1247 = vmatmul.mubr.f32.gmra.mxu0 %v1133
      %v1248 = vpop.f32.mrf.mxu0
      %v1249 = vadd.f32 %v1127, %v1248
      %v1250 = vpop.f32.mrf.mxu0
      %1251 = vmatprep.mubr.f32.mxu0 0.0
      %1252 = vmatmul.mubr.f32.gmra.mxu0 %v1136
      %v1253 = vpop.f32.mrf.mxu0
      %v1254 = vadd.f32 %v1127, %v1253
      %v1255 = vpop.f32.mrf.mxu0
      %1256 = vmatprep.mubr.f32.mxu0 0.0
      %1257 = vmatmul.mubr.f32.gmra.mxu0 %v1139
      %v1258 = vpop.f32.mrf.mxu0
      %v1259 = vadd.f32 %v1127, %v1258
      %v1260 = vpop.f32.mrf.mxu0
      %1261 = vmatprep.mubr.f32.mxu0 0.0
      %1262 = vmatmul.mubr.f32.gmra.mxu0 %v1142
      %v1263 = vpop.f32.mrf.mxu0
      %v1264 = vadd.f32 %v1127, %v1263
      %v1265 = vpop.f32.mrf.mxu0
      %1266 = vmatprep.mubr.f32.mxu0 0.0
      %1267 = vmatmul.mubr.f32.gmra.mxu0 %v1145
      %v1268 = vpop.f32.mrf.mxu0
      %v1269 = vadd.f32 %v1127, %v1268
      %v1270 = vpop.f32.mrf.mxu0
      %1271 = vmatprep.mubr.f32.mxu0 0.0
      %1272 = vmatmul.mubr.f32.gmra.mxu0 %v1148
      %v1273 = vpop.f32.mrf.mxu0
      %v1274 = vadd.f32 %v1127, %v1273
      %v1275 = vpop.f32.mrf.mxu0
      %1276 = vmatprep.mubr.f32.mxu0 0.0
      %1277 = vmatmul.mubr.f32.gmra.mxu0 %v1151
      %v1278 = vpop.f32.mrf.mxu0
      %v1279 = vadd.f32 %v1127, %v1278
      %v1280 = vpop.f32.mrf.mxu0
      %1281 = vmatprep.mubr.f32.mxu0 0.0
      %1282 = vmatmul.mubr.f32.gmra.mxu0 %v1154
      %v1283 = vpop.f32.mrf.mxu0
      %v1284 = vadd.f32 %v1127, %v1283
      %v1285 = vpop.f32.mrf.mxu0
      %1286 = vmatprep.mubr.f32.mxu0 0.0
      %1287 = vmatmul.mubr.f32.gmra.mxu0 %v1157
      %v1288 = vpop.f32.mrf.mxu0
      %v1289 = vadd.f32 %v1127, %v1288
      %v1290 = vpop.f32.mrf.mxu0
      %1291 = vmatprep.mubr.f32.mxu0 0.0
      %1292 = vmatmul.mubr.f32.gmra.mxu0 %v1160
      %v1293 = vpop.f32.mrf.mxu0
      %v1294 = vadd.f32 %v1127, %v1293
      %v1295 = vpop.f32.mrf.mxu0
      %1296 = vmatprep.mubr.f32.mxu0 0.0
      %1297 = vmatmul.mubr.f32.gmra.mxu0 %v1163
      %v1298 = vpop.f32.mrf.mxu0
      %v1299 = vadd.f32 %v1127, %v1298
      %v1300 = vpop.f32.mrf.mxu0
      %1301 = vmatprep.mubr.f32.mxu0 0.0
      %1302 = vmatmul.mubr.f32.gmra.mxu0 %v1166
      %v1303 = vpop.f32.mrf.mxu0
      %v1304 = vadd.f32 %v1127, %v1303
      %v1305 = vpop.f32.mrf.mxu0
      %1306 = vmatprep.mubr.f32.mxu0 0.0
      %1307 = vmatmul.mubr.f32.gmra.mxu0 %v1169
      %v1308 = vpop.f32.mrf.mxu0
      %v1309 = vadd.f32 %v1127, %v1308
      %v1310 = vpop.f32.mrf.mxu0
      %1311 = vmatprep.mubr.f32.mxu0 0.0
      %1312 = vmatmul.mubr.f32.gmra.mxu0 %v1172
      %v1313 = vpop.f32.mrf.mxu0
      %v1314 = vadd.f32 %v1127, %v1313
      %v1315 = vpop.f32.mrf.mxu0
      %1316 = vmatprep.mubr.f32.mxu0 0.0
      %1317 = vmatmul.mubr.f32.gmra.mxu0 %v1175
      %v1318 = vpop.f32.mrf.mxu0
      %v1319 = vadd.f32 %v1127, %v1318
      %v1320 = vpop.f32.mrf.mxu0
      %1321 = vdwg.mxu0
      %v1322 = vld [vmem:[%s9] sm:$0x7]
      %v1323 = vld [vmem:[%s10] sm:$0xff]
      %v1324 = vld [vmem:[%s10 + $0x8] sm:$0xff]
      %v1325 = vld [vmem:[%s10 + $0x10] sm:$0xff]
      %v1326 = vld [vmem:[%s10 + $0x18] sm:$0xff]
      %v1327 = vld [vmem:[%s11] sm:$0x1]
      %1328 = vmatprep.subr.mxu0 0.0
      %1329 = vmatpush1.msra.mxu0 0.0
      %1330 = vmatprep.subr.mxu0 0.0
      %1331 = vmatpush1.msra.mxu0 0.0
      %1332 = vmatprep.subr.mxu0 0.0
      %1333 = vmatpush1.msra.mxu0 0.0
      %1334 = vmatprep.subr.mxu0 0.0
      %1335 = vmatpush1.msra.mxu0 0.0
      %1336 = vmatprep.subr.mxu0 0.0
      %1337 = vmatpush1.msra.mxu0 0.0
      %1338 = vmatprep.subr.mxu0 0.0
      %1339 = vmatpush1.msra.mxu0 0.0
      %1340 = vmatprep.subr.mxu0 0.0
      %1341 = vmatpush1.msra.mxu0 0.0
      %1342 = vmatprep.subr.mxu0 0.0
      %1343 = vmatpush1.msra.mxu0 0.0
      %1344 = vmatprep.subr.mxu0 0.0
      %1345 = vmatpush1.msra.mxu0 0.0
      %1346 = vmatprep.subr.mxu0 0.0
      %1347 = vmatpush1.msra.mxu0 0.0
      %1348 = vmatprep.subr.mxu0 0.0
      %1349 = vmatpush1.msra.mxu0 0.0
      %1350 = vmatprep.subr.mxu0 0.0
      %1351 = vmatpush1.msra.mxu0 0.0
      %1352 = vmatprep.subr.mxu0 0.0
      %1353 = vmatpush1.msra.mxu0 %v1326
      %1354 = vmatprep.subr.mxu0 0.0
      %1355 = vmatpush1.msra.mxu0 %v1325
      %1356 = vmatprep.subr.mxu0 0.0
      %1357 = vmatpush1.msra.mxu0 %v1324
      %1358 = vmatprep.subr.mxu0 0.0
      %1359 = vmatpush1.msra.mxu0 %v1323
      %1360 = vmatprep.subr.mxu0 0.0
      %1361 = vmatpush2.msra.mxu0 0.0
      %1362 = vmatprep.subr.mxu0 0.0
      %1363 = vmatpush2.msra.mxu0 0.0
      %1364 = vmatprep.subr.mxu0 0.0
      %1365 = vmatpush2.msra.mxu0 0.0
      %1366 = vmatprep.subr.mxu0 0.0
      %1367 = vmatpush2.msra.mxu0 0.0
      %1368 = vmatprep.subr.mxu0 0.0
      %1369 = vmatpush2.msra.mxu0 0.0
      %1370 = vmatprep.subr.mxu0 0.0
      %1371 = vmatpush2.msra.mxu0 0.0
      %1372 = vmatprep.subr.mxu0 0.0
      %1373 = vmatpush2.msra.mxu0 0.0
      %1374 = vmatprep.subr.mxu0 0.0
      %1375 = vmatpush2.msra.mxu0 0.0
      %1376 = vmatprep.subr.mxu0 0.0
      %1377 = vmatpush2.msra.mxu0 0.0
      %1378 = vmatprep.subr.mxu0 0.0
      %1379 = vmatpush2.msra.mxu0 0.0
      %1380 = vmatprep.subr.mxu0 0.0
      %1381 = vmatpush2.msra.mxu0 0.0
      %1382 = vmatprep.subr.mxu0 0.0
      %1383 = vmatpush2.msra.mxu0 0.0
      %1384 = vmatprep.subr.mxu0 0.0
      %1385 = vmatpush2.msra.mxu0 0.0
      %1386 = vmatprep.subr.mxu0 0.0
      %1387 = vmatpush2.msra.mxu0 0.0
      %1388 = vmatprep.subr.mxu0 0.0
      %1389 = vmatpush2.msra.mxu0 0.0
      %1390 = vmatprep.subr.mxu0 0.0
      %1391 = vmatpush2.msra.mxu0 0.0
      %1392 = vmatprep.mubr.f32.mxu0 0.0
      %1393 = vmatmul.mubr.f32.gmra.mxu0 %v586
      %v1394 = vpop.f32.mrf.mxu0
      %v1395 = vadd.f32 0.0, %v1394
      %v1396 = vpop.f32.mrf.mxu0
      %1397 = vdwg.mxu0
      %v1398 = vlaneseq
      %v1399 = vshrl.u32 %v1398, 7
      %v1400 = vsub.s32 0, %v1399
      %v1401 = vrot.slane %v1395, %v1400
      %vm1402 = vcmask 23552
      %v1404 = vsel %vm1402, %v1244, 0
      %v1407 = vsel %vm1402, %v1249, 0
      %v1410 = vsel %vm1402, %v1254, 0
      %v1413 = vsel %vm1402, %v1259, 0
      %v1416 = vsel %vm1402, %v1264, 0
      %v1419 = vsel %vm1402, %v1269, 0
      %v1422 = vsel %vm1402, %v1274, 0
      %v1425 = vsel %vm1402, %v1279, 0
      %v1428 = vsel %vm1402, %v1284, 0
      %v1431 = vsel %vm1402, %v1289, 0
      %v1434 = vsel %vm1402, %v1294, 0
      %v1437 = vsel %vm1402, %v1299, 0
      %v1440 = vsel %vm1402, %v1304, 0
      %v1443 = vsel %vm1402, %v1309, 0
      %v1446 = vsel %vm1402, %v1314, 0
      %v1449 = vsel %vm1402, %v1319, 0
      %vm1451 = vcmask 1042432
      %v1453 = vsel %vm1451, %v1322, 0
      %1455 = vmatprep.subr.mxu0 0.0
      %1456 = vmatpush1.msra.mxu0 0.0
      %1457 = vmatprep.subr.mxu0 0.0
      %1458 = vmatpush1.msra.mxu0 0.0
      %1459 = vmatprep.subr.mxu0 0.0
      %1460 = vmatpush1.msra.mxu0 0.0
      %1461 = vmatprep.subr.mxu0 0.0
      %1462 = vmatpush1.msra.mxu0 0.0
      %1463 = vmatprep.subr.mxu0 0.0
      %1464 = vmatpush1.msra.mxu0 0.0
      %1465 = vmatprep.subr.mxu0 0.0
      %1466 = vmatpush1.msra.mxu0 0.0
      %1467 = vmatprep.subr.mxu0 0.0
      %1468 = vmatpush1.msra.mxu0 0.0
      %1469 = vmatprep.subr.mxu0 0.0
      %1470 = vmatpush1.msra.mxu0 0.0
      %1471 = vmatprep.subr.mxu0 0.0
      %1472 = vmatpush1.msra.mxu0 0.0
      %1473 = vmatprep.subr.mxu0 0.0
      %1474 = vmatpush1.msra.mxu0 0.0
      %1475 = vmatprep.subr.mxu0 0.0
      %1476 = vmatpush1.msra.mxu0 0.0
      %1477 = vmatprep.subr.mxu0 0.0
      %1478 = vmatpush1.msra.mxu0 0.0
      %1479 = vmatprep.subr.mxu0 0.0
      %1480 = vmatpush1.msra.mxu0 0.0
      %1481 = vmatprep.subr.mxu0 0.0
      %1482 = vmatpush1.msra.mxu0 0.0
      %1483 = vmatprep.subr.mxu0 0.0
      %1484 = vmatpush1.msra.mxu0 0.0
      %1485 = vmatprep.subr.mxu0 0.0
      %1486 = vmatpush1.msra.mxu0 %v1453
      %1487 = vmatprep.subr.mxu0 0.0
      %1488 = vmatpush2.msra.mxu0 0.0
      %1489 = vmatprep.subr.mxu0 0.0
      %1490 = vmatpush2.msra.mxu0 0.0
      %1491 = vmatprep.subr.mxu0 0.0
      %1492 = vmatpush2.msra.mxu0 0.0
      %1493 = vmatprep.subr.mxu0 0.0
      %1494 = vmatpush2.msra.mxu0 0.0
      %1495 = vmatprep.subr.mxu0 0.0
      %1496 = vmatpush2.msra.mxu0 0.0
      %1497 = vmatprep.subr.mxu0 0.0
      %1498 = vmatpush2.msra.mxu0 0.0
      %1499 = vmatprep.subr.mxu0 0.0
      %1500 = vmatpush2.msra.mxu0 0.0
      %1501 = vmatprep.subr.mxu0 0.0
      %1502 = vmatpush2.msra.mxu0 0.0
      %1503 = vmatprep.subr.mxu0 0.0
      %1504 = vmatpush2.msra.mxu0 0.0
      %1505 = vmatprep.subr.mxu0 0.0
      %1506 = vmatpush2.msra.mxu0 0.0
      %1507 = vmatprep.subr.mxu0 0.0
      %1508 = vmatpush2.msra.mxu0 0.0
      %1509 = vmatprep.subr.mxu0 0.0
      %1510 = vmatpush2.msra.mxu0 0.0
      %1511 = vmatprep.subr.mxu0 0.0
      %1512 = vmatpush2.msra.mxu0 0.0
      %1513 = vmatprep.subr.mxu0 0.0
      %1514 = vmatpush2.msra.mxu0 0.0
      %1515 = vmatprep.subr.mxu0 0.0
      %1516 = vmatpush2.msra.mxu0 0.0
      %1517 = vmatprep.subr.mxu0 0.0
      %1518 = vmatpush2.msra.mxu0 0.0
      %1519 = vmatprep.mubr.f32.mxu0 0.0
      %1520 = vmatmul.mubr.f32.gmra.mxu0 %v1404
      %v1521 = vpop.f32.mrf.mxu0
      %v1522 = vadd.f32 %v1401, %v1521
      %v1523 = vpop.f32.mrf.mxu0
      %1524 = vmatprep.mubr.f32.mxu0 0.0
      %1525 = vmatmul.mubr.f32.gmra.mxu0 %v1407
      %v1526 = vpop.f32.mrf.mxu0
      %v1527 = vadd.f32 %v1401, %v1526
      %v1528 = vpop.f32.mrf.mxu0
      %1529 = vmatprep.mubr.f32.mxu0 0.0
      %1530 = vmatmul.mubr.f32.gmra.mxu0 %v1410
      %v1531 = vpop.f32.mrf.mxu0
      %v1532 = vadd.f32 %v1401, %v1531
      %v1533 = vpop.f32.mrf.mxu0
      %1534 = vmatprep.mubr.f32.mxu0 0.0
      %1535 = vmatmul.mubr.f32.gmra.mxu0 %v1413
      %v1536 = vpop.f32.mrf.mxu0
      %v1537 = vadd.f32 %v1401, %v1536
      %v1538 = vpop.f32.mrf.mxu0
      %1539 = vmatprep.mubr.f32.mxu0 0.0
      %1540 = vmatmul.mubr.f32.gmra.mxu0 %v1416
      %v1541 = vpop.f32.mrf.mxu0
      %v1542 = vadd.f32 %v1401, %v1541
      %v1543 = vpop.f32.mrf.mxu0
      %1544 = vmatprep.mubr.f32.mxu0 0.0
      %1545 = vmatmul.mubr.f32.gmra.mxu0 %v1419
      %v1546 = vpop.f32.mrf.mxu0
      %v1547 = vadd.f32 %v1401, %v1546
      %v1548 = vpop.f32.mrf.mxu0
      %1549 = vmatprep.mubr.f32.mxu0 0.0
      %1550 = vmatmul.mubr.f32.gmra.mxu0 %v1422
      %v1551 = vpop.f32.mrf.mxu0
      %v1552 = vadd.f32 %v1401, %v1551
      %v1553 = vpop.f32.mrf.mxu0
      %1554 = vmatprep.mubr.f32.mxu0 0.0
      %1555 = vmatmul.mubr.f32.gmra.mxu0 %v1425
      %v1556 = vpop.f32.mrf.mxu0
      %v1557 = vadd.f32 %v1401, %v1556
      %v1558 = vpop.f32.mrf.mxu0
      %1559 = vmatprep.mubr.f32.mxu0 0.0
      %1560 = vmatmul.mubr.f32.gmra.mxu0 %v1428
      %v1561 = vpop.f32.mrf.mxu0
      %v1562 = vadd.f32 %v1401, %v1561
      %v1563 = vpop.f32.mrf.mxu0
      %1564 = vmatprep.mubr.f32.mxu0 0.0
      %1565 = vmatmul.mubr.f32.gmra.mxu0 %v1431
      %v1566 = vpop.f32.mrf.mxu0
      %v1567 = vadd.f32 %v1401, %v1566
      %v1568 = vpop.f32.mrf.mxu0
      %1569 = vmatprep.mubr.f32.mxu0 0.0
      %1570 = vmatmul.mubr.f32.gmra.mxu0 %v1434
      %v1571 = vpop.f32.mrf.mxu0
      %v1572 = vadd.f32 %v1401, %v1571
      %v1573 = vpop.f32.mrf.mxu0
      %1574 = vmatprep.mubr.f32.mxu0 0.0
      %1575 = vmatmul.mubr.f32.gmra.mxu0 %v1437
      %v1576 = vpop.f32.mrf.mxu0
      %v1577 = vadd.f32 %v1401, %v1576
      %v1578 = vpop.f32.mrf.mxu0
      %1579 = vmatprep.mubr.f32.mxu0 0.0
      %1580 = vmatmul.mubr.f32.gmra.mxu0 %v1440
      %v1581 = vpop.f32.mrf.mxu0
      %v1582 = vadd.f32 %v1401, %v1581
      %v1583 = vpop.f32.mrf.mxu0
      %1584 = vmatprep.mubr.f32.mxu0 0.0
      %1585 = vmatmul.mubr.f32.gmra.mxu0 %v1443
      %v1586 = vpop.f32.mrf.mxu0
      %v1587 = vadd.f32 %v1401, %v1586
      %v1588 = vpop.f32.mrf.mxu0
      %1589 = vmatprep.mubr.f32.mxu0 0.0
      %1590 = vmatmul.mubr.f32.gmra.mxu0 %v1446
      %v1591 = vpop.f32.mrf.mxu0
      %v1592 = vadd.f32 %v1401, %v1591
      %v1593 = vpop.f32.mrf.mxu0
      %1594 = vmatprep.mubr.f32.mxu0 0.0
      %1595 = vmatmul.mubr.f32.gmra.mxu0 %v1449
      %v1596 = vpop.f32.mrf.mxu0
      %v1597 = vadd.f32 %v1401, %v1596
      %v1598 = vpop.f32.mrf.mxu0
      %1599 = vdwg.mxu0
      %v1601 = vlaneseq
      %v1602 = vshrl.u32 %v1601, 7
      %v1603 = vsub.s32 0, %v1602
      %v1604 = vrot.slane %v1327, %v1603
      %v1606 = vadd.f32 %v1522, %v1604
      %v1607 = vadd.f32 %v1527, %v1604
      %v1608 = vadd.f32 %v1532, %v1604
      %v1609 = vadd.f32 %v1537, %v1604
      %v1610 = vadd.f32 %v1542, %v1604
      %v1611 = vadd.f32 %v1547, %v1604
      %v1612 = vadd.f32 %v1552, %v1604
      %v1613 = vadd.f32 %v1557, %v1604
      %v1614 = vadd.f32 %v1562, %v1604
      %v1615 = vadd.f32 %v1567, %v1604
      %v1616 = vadd.f32 %v1572, %v1604
      %v1617 = vadd.f32 %v1577, %v1604
      %v1618 = vadd.f32 %v1582, %v1604
      %v1619 = vadd.f32 %v1587, %v1604
      %v1620 = vadd.f32 %v1592, %v1604
      %v1621 = vadd.f32 %v1597, %v1604
      %v1622 = vmax.f32 %v1606, 0.0
      %v1623 = vmax.f32 %v1607, 0.0
      %v1624 = vmax.f32 %v1608, 0.0
      %v1625 = vmax.f32 %v1609, 0.0
      %v1626 = vmax.f32 %v1610, 0.0
      %v1627 = vmax.f32 %v1611, 0.0
      %v1628 = vmax.f32 %v1612, 0.0
      %v1629 = vmax.f32 %v1613, 0.0
      %v1630 = vmax.f32 %v1614, 0.0
      %v1631 = vmax.f32 %v1615, 0.0
      %v1632 = vmax.f32 %v1616, 0.0
      %v1633 = vmax.f32 %v1617, 0.0
      %v1634 = vmax.f32 %v1618, 0.0
      %v1635 = vmax.f32 %v1619, 0.0
      %v1636 = vmax.f32 %v1620, 0.0
      %v1637 = vmax.f32 %v1621, 0.0
      %v1638 = vld [vmem:[%s12] sm:$0xff]
      %v1639 = vld [vmem:[%s12 + $0x8] sm:$0xff]
      %v1640 = vld [vmem:[%s12 + $0x10] sm:$0xff]
      %v1641 = vld [vmem:[%s12 + $0x18] sm:$0xff]
      %v1642 = vld [vmem:[%s13] sm:$0x1]
      %v1644 = vlaneseq
      %v1645 = vshrl.u32 %v1644, 7
      %v1646 = vsub.s32 0, %v1645
      %v1647 = vrot.slane %v1642, %v1646
      %v1650 = vsel %vm584, %v1622, 0
      %v1653 = vsel %vm584, %v1623, 0
      %v1656 = vsel %vm584, %v1624, 0
      %v1659 = vsel %vm584, %v1625, 0
      %v1662 = vsel %vm584, %v1626, 0
      %v1665 = vsel %vm584, %v1627, 0
      %v1668 = vsel %vm584, %v1628, 0
      %v1671 = vsel %vm584, %v1629, 0
      %v1674 = vsel %vm584, %v1630, 0
      %v1677 = vsel %vm584, %v1631, 0
      %v1680 = vsel %vm584, %v1632, 0
      %v1683 = vsel %vm584, %v1633, 0
      %v1686 = vsel %vm584, %v1634, 0
      %v1689 = vsel %vm584, %v1635, 0
      %v1692 = vsel %vm584, %v1636, 0
      %v1695 = vsel %vm584, %v1637, 0
      %1697 = vmatprep.subr.mxu0 0.0
      %1698 = vmatpush1.msra.mxu0 0.0
      %1699 = vmatprep.subr.mxu0 0.0
      %1700 = vmatpush1.msra.mxu0 0.0
      %1701 = vmatprep.subr.mxu0 0.0
      %1702 = vmatpush1.msra.mxu0 0.0
      %1703 = vmatprep.subr.mxu0 0.0
      %1704 = vmatpush1.msra.mxu0 0.0
      %1705 = vmatprep.subr.mxu0 0.0
      %1706 = vmatpush1.msra.mxu0 0.0
      %1707 = vmatprep.subr.mxu0 0.0
      %1708 = vmatpush1.msra.mxu0 0.0
      %1709 = vmatprep.subr.mxu0 0.0
      %1710 = vmatpush1.msra.mxu0 0.0
      %1711 = vmatprep.subr.mxu0 0.0
      %1712 = vmatpush1.msra.mxu0 0.0
      %1713 = vmatprep.subr.mxu0 0.0
      %1714 = vmatpush1.msra.mxu0 0.0
      %1715 = vmatprep.subr.mxu0 0.0
      %1716 = vmatpush1.msra.mxu0 0.0
      %1717 = vmatprep.subr.mxu0 0.0
      %1718 = vmatpush1.msra.mxu0 0.0
      %1719 = vmatprep.subr.mxu0 0.0
      %1720 = vmatpush1.msra.mxu0 0.0
      %1721 = vmatprep.subr.mxu0 0.0
      %1722 = vmatpush1.msra.mxu0 %v1641
      %1723 = vmatprep.subr.mxu0 0.0
      %1724 = vmatpush1.msra.mxu0 %v1640
      %1725 = vmatprep.subr.mxu0 0.0
      %1726 = vmatpush1.msra.mxu0 %v1639
      %1727 = vmatprep.subr.mxu0 0.0
      %1728 = vmatpush1.msra.mxu0 %v1638
      %1729 = vmatprep.subr.mxu0 0.0
      %1730 = vmatpush2.msra.mxu0 0.0
      %1731 = vmatprep.subr.mxu0 0.0
      %1732 = vmatpush2.msra.mxu0 0.0
      %1733 = vmatprep.subr.mxu0 0.0
      %1734 = vmatpush2.msra.mxu0 0.0
      %1735 = vmatprep.subr.mxu0 0.0
      %1736 = vmatpush2.msra.mxu0 0.0
      %1737 = vmatprep.subr.mxu0 0.0
      %1738 = vmatpush2.msra.mxu0 0.0
      %1739 = vmatprep.subr.mxu0 0.0
      %1740 = vmatpush2.msra.mxu0 0.0
      %1741 = vmatprep.subr.mxu0 0.0
      %1742 = vmatpush2.msra.mxu0 0.0
      %1743 = vmatprep.subr.mxu0 0.0
      %1744 = vmatpush2.msra.mxu0 0.0
      %1745 = vmatprep.subr.mxu0 0.0
      %1746 = vmatpush2.msra.mxu0 0.0
      %1747 = vmatprep.subr.mxu0 0.0
      %1748 = vmatpush2.msra.mxu0 0.0
      %1749 = vmatprep.subr.mxu0 0.0
      %1750 = vmatpush2.msra.mxu0 0.0
      %1751 = vmatprep.subr.mxu0 0.0
      %1752 = vmatpush2.msra.mxu0 0.0
      %1753 = vmatprep.subr.mxu0 0.0
      %1754 = vmatpush2.msra.mxu0 0.0
      %1755 = vmatprep.subr.mxu0 0.0
      %1756 = vmatpush2.msra.mxu0 0.0
      %1757 = vmatprep.subr.mxu0 0.0
      %1758 = vmatpush2.msra.mxu0 0.0
      %1759 = vmatprep.subr.mxu0 0.0
      %1760 = vmatpush2.msra.mxu0 0.0
      %1761 = vmatprep.mubr.f32.mxu0 0.0
      %1762 = vmatmul.mubr.f32.gmra.mxu0 %v1650
      %v1763 = vpop.f32.mrf.mxu0
      %v1764 = vadd.f32 %v1647, %v1763
      %v1765 = vpop.f32.mrf.mxu0
      %1766 = vmatprep.mubr.f32.mxu0 0.0
      %1767 = vmatmul.mubr.f32.gmra.mxu0 %v1653
      %v1768 = vpop.f32.mrf.mxu0
      %v1769 = vadd.f32 %v1647, %v1768
      %v1770 = vpop.f32.mrf.mxu0
      %1771 = vmatprep.mubr.f32.mxu0 0.0
      %1772 = vmatmul.mubr.f32.gmra.mxu0 %v1656
      %v1773 = vpop.f32.mrf.mxu0
      %v1774 = vadd.f32 %v1647, %v1773
      %v1775 = vpop.f32.mrf.mxu0
      %1776 = vmatprep.mubr.f32.mxu0 0.0
      %1777 = vmatmul.mubr.f32.gmra.mxu0 %v1659
      %v1778 = vpop.f32.mrf.mxu0
      %v1779 = vadd.f32 %v1647, %v1778
      %v1780 = vpop.f32.mrf.mxu0
      %1781 = vmatprep.mubr.f32.mxu0 0.0
      %1782 = vmatmul.mubr.f32.gmra.mxu0 %v1662
      %v1783 = vpop.f32.mrf.mxu0
      %v1784 = vadd.f32 %v1647, %v1783
      %v1785 = vpop.f32.mrf.mxu0
      %1786 = vmatprep.mubr.f32.mxu0 0.0
      %1787 = vmatmul.mubr.f32.gmra.mxu0 %v1665
      %v1788 = vpop.f32.mrf.mxu0
      %v1789 = vadd.f32 %v1647, %v1788
      %v1790 = vpop.f32.mrf.mxu0
      %1791 = vmatprep.mubr.f32.mxu0 0.0
      %1792 = vmatmul.mubr.f32.gmra.mxu0 %v1668
      %v1793 = vpop.f32.mrf.mxu0
      %v1794 = vadd.f32 %v1647, %v1793
      %v1795 = vpop.f32.mrf.mxu0
      %1796 = vmatprep.mubr.f32.mxu0 0.0
      %1797 = vmatmul.mubr.f32.gmra.mxu0 %v1671
      %v1798 = vpop.f32.mrf.mxu0
      %v1799 = vadd.f32 %v1647, %v1798
      %v1800 = vpop.f32.mrf.mxu0
      %1801 = vmatprep.mubr.f32.mxu0 0.0
      %1802 = vmatmul.mubr.f32.gmra.mxu0 %v1674
      %v1803 = vpop.f32.mrf.mxu0
      %v1804 = vadd.f32 %v1647, %v1803
      %v1805 = vpop.f32.mrf.mxu0
      %1806 = vmatprep.mubr.f32.mxu0 0.0
      %1807 = vmatmul.mubr.f32.gmra.mxu0 %v1677
      %v1808 = vpop.f32.mrf.mxu0
      %v1809 = vadd.f32 %v1647, %v1808
      %v1810 = vpop.f32.mrf.mxu0
      %1811 = vmatprep.mubr.f32.mxu0 0.0
      %1812 = vmatmul.mubr.f32.gmra.mxu0 %v1680
      %v1813 = vpop.f32.mrf.mxu0
      %v1814 = vadd.f32 %v1647, %v1813
      %v1815 = vpop.f32.mrf.mxu0
      %1816 = vmatprep.mubr.f32.mxu0 0.0
      %1817 = vmatmul.mubr.f32.gmra.mxu0 %v1683
      %v1818 = vpop.f32.mrf.mxu0
      %v1819 = vadd.f32 %v1647, %v1818
      %v1820 = vpop.f32.mrf.mxu0
      %1821 = vmatprep.mubr.f32.mxu0 0.0
      %1822 = vmatmul.mubr.f32.gmra.mxu0 %v1686
      %v1823 = vpop.f32.mrf.mxu0
      %v1824 = vadd.f32 %v1647, %v1823
      %v1825 = vpop.f32.mrf.mxu0
      %1826 = vmatprep.mubr.f32.mxu0 0.0
      %1827 = vmatmul.mubr.f32.gmra.mxu0 %v1689
      %v1828 = vpop.f32.mrf.mxu0
      %v1829 = vadd.f32 %v1647, %v1828
      %v1830 = vpop.f32.mrf.mxu0
      %1831 = vmatprep.mubr.f32.mxu0 0.0
      %1832 = vmatmul.mubr.f32.gmra.mxu0 %v1692
      %v1833 = vpop.f32.mrf.mxu0
      %v1834 = vadd.f32 %v1647, %v1833
      %v1835 = vpop.f32.mrf.mxu0
      %1836 = vmatprep.mubr.f32.mxu0 0.0
      %1837 = vmatmul.mubr.f32.gmra.mxu0 %v1695
      %v1838 = vpop.f32.mrf.mxu0
      %v1839 = vadd.f32 %v1647, %v1838
      %v1840 = vpop.f32.mrf.mxu0
      %1841 = vdwg.mxu0
      %v1842 = vmax.f32 %v1764, 0.0
      %v1843 = vmax.f32 %v1769, 0.0
      %v1844 = vmax.f32 %v1774, 0.0
      %v1845 = vmax.f32 %v1779, 0.0
      %v1846 = vmax.f32 %v1784, 0.0
      %v1847 = vmax.f32 %v1789, 0.0
      %v1848 = vmax.f32 %v1794, 0.0
      %v1849 = vmax.f32 %v1799, 0.0
      %v1850 = vmax.f32 %v1804, 0.0
      %v1851 = vmax.f32 %v1809, 0.0
      %v1852 = vmax.f32 %v1814, 0.0
      %v1853 = vmax.f32 %v1819, 0.0
      %v1854 = vmax.f32 %v1824, 0.0
      %v1855 = vmax.f32 %v1829, 0.0
      %v1856 = vmax.f32 %v1834, 0.0
      %v1857 = vmax.f32 %v1839, 0.0
      %v1858 = vld [vmem:[%s14] sm:$0xff]
      %v1859 = vld [vmem:[%s14 + $0x8] sm:$0xff]
      %v1860 = vld [vmem:[%s14 + $0x10] sm:$0xff]
      %v1861 = vld [vmem:[%s14 + $0x18] sm:$0xff]
      %v1862 = vld [vmem:[%s15] sm:$0x1]
      %v1864 = vlaneseq
      %v1865 = vshrl.u32 %v1864, 7
      %v1866 = vsub.s32 0, %v1865
      %v1867 = vrot.slane %v1862, %v1866
      %v1870 = vsel %vm584, %v1842, 0
      %v1873 = vsel %vm584, %v1843, 0
      %v1876 = vsel %vm584, %v1844, 0
      %v1879 = vsel %vm584, %v1845, 0
      %v1882 = vsel %vm584, %v1846, 0
      %v1885 = vsel %vm584, %v1847, 0
      %v1888 = vsel %vm584, %v1848, 0
      %v1891 = vsel %vm584, %v1849, 0
      %v1894 = vsel %vm584, %v1850, 0
      %v1897 = vsel %vm584, %v1851, 0
      %v1900 = vsel %vm584, %v1852, 0
      %v1903 = vsel %vm584, %v1853, 0
      %v1906 = vsel %vm584, %v1854, 0
      %v1909 = vsel %vm584, %v1855, 0
      %v1912 = vsel %vm584, %v1856, 0
      %v1915 = vsel %vm584, %v1857, 0
      %1917 = vmatprep.subr.mxu0 0.0
      %1918 = vmatpush1.msra.mxu0 0.0
      %1919 = vmatprep.subr.mxu0 0.0
      %1920 = vmatpush1.msra.mxu0 0.0
      %1921 = vmatprep.subr.mxu0 0.0
      %1922 = vmatpush1.msra.mxu0 0.0
      %1923 = vmatprep.subr.mxu0 0.0
      %1924 = vmatpush1.msra.mxu0 0.0
      %1925 = vmatprep.subr.mxu0 0.0
      %1926 = vmatpush1.msra.mxu0 0.0
      %1927 = vmatprep.subr.mxu0 0.0
      %1928 = vmatpush1.msra.mxu0 0.0
      %1929 = vmatprep.subr.mxu0 0.0
      %1930 = vmatpush1.msra.mxu0 0.0
      %1931 = vmatprep.subr.mxu0 0.0
      %1932 = vmatpush1.msra.mxu0 0.0
      %1933 = vmatprep.subr.mxu0 0.0
      %1934 = vmatpush1.msra.mxu0 0.0
      %1935 = vmatprep.subr.mxu0 0.0
      %1936 = vmatpush1.msra.mxu0 0.0
      %1937 = vmatprep.subr.mxu0 0.0
      %1938 = vmatpush1.msra.mxu0 0.0
      %1939 = vmatprep.subr.mxu0 0.0
      %1940 = vmatpush1.msra.mxu0 0.0
      %1941 = vmatprep.subr.mxu0 0.0
      %1942 = vmatpush1.msra.mxu0 %v1861
      %1943 = vmatprep.subr.mxu0 0.0
      %1944 = vmatpush1.msra.mxu0 %v1860
      %1945 = vmatprep.subr.mxu0 0.0
      %1946 = vmatpush1.msra.mxu0 %v1859
      %1947 = vmatprep.subr.mxu0 0.0
      %1948 = vmatpush1.msra.mxu0 %v1858
      %1949 = vmatprep.subr.mxu0 0.0
      %1950 = vmatpush2.msra.mxu0 0.0
      %1951 = vmatprep.subr.mxu0 0.0
      %1952 = vmatpush2.msra.mxu0 0.0
      %1953 = vmatprep.subr.mxu0 0.0
      %1954 = vmatpush2.msra.mxu0 0.0
      %1955 = vmatprep.subr.mxu0 0.0
      %1956 = vmatpush2.msra.mxu0 0.0
      %1957 = vmatprep.subr.mxu0 0.0
      %1958 = vmatpush2.msra.mxu0 0.0
      %1959 = vmatprep.subr.mxu0 0.0
      %1960 = vmatpush2.msra.mxu0 0.0
      %1961 = vmatprep.subr.mxu0 0.0
      %1962 = vmatpush2.msra.mxu0 0.0
      %1963 = vmatprep.subr.mxu0 0.0
      %1964 = vmatpush2.msra.mxu0 0.0
      %1965 = vmatprep.subr.mxu0 0.0
      %1966 = vmatpush2.msra.mxu0 0.0
      %1967 = vmatprep.subr.mxu0 0.0
      %1968 = vmatpush2.msra.mxu0 0.0
      %1969 = vmatprep.subr.mxu0 0.0
      %1970 = vmatpush2.msra.mxu0 0.0
      %1971 = vmatprep.subr.mxu0 0.0
      %1972 = vmatpush2.msra.mxu0 0.0
      %1973 = vmatprep.subr.mxu0 0.0
      %1974 = vmatpush2.msra.mxu0 0.0
      %1975 = vmatprep.subr.mxu0 0.0
      %1976 = vmatpush2.msra.mxu0 0.0
      %1977 = vmatprep.subr.mxu0 0.0
      %1978 = vmatpush2.msra.mxu0 0.0
      %1979 = vmatprep.subr.mxu0 0.0
      %1980 = vmatpush2.msra.mxu0 0.0
      %1981 = vmatprep.mubr.f32.mxu0 0.0
      %1982 = vmatmul.mubr.f32.gmra.mxu0 %v1870
      %v1983 = vpop.f32.mrf.mxu0
      %v1984 = vadd.f32 %v1867, %v1983
      %v1985 = vpop.f32.mrf.mxu0
      %1986 = vmatprep.mubr.f32.mxu0 0.0
      %1987 = vmatmul.mubr.f32.gmra.mxu0 %v1873
      %v1988 = vpop.f32.mrf.mxu0
      %v1989 = vadd.f32 %v1867, %v1988
      %v1990 = vpop.f32.mrf.mxu0
      %1991 = vmatprep.mubr.f32.mxu0 0.0
      %1992 = vmatmul.mubr.f32.gmra.mxu0 %v1876
      %v1993 = vpop.f32.mrf.mxu0
      %v1994 = vadd.f32 %v1867, %v1993
      %v1995 = vpop.f32.mrf.mxu0
      %1996 = vmatprep.mubr.f32.mxu0 0.0
      %1997 = vmatmul.mubr.f32.gmra.mxu0 %v1879
      %v1998 = vpop.f32.mrf.mxu0
      %v1999 = vadd.f32 %v1867, %v1998
      %v2000 = vpop.f32.mrf.mxu0
      %2001 = vmatprep.mubr.f32.mxu0 0.0
      %2002 = vmatmul.mubr.f32.gmra.mxu0 %v1882
      %v2003 = vpop.f32.mrf.mxu0
      %v2004 = vadd.f32 %v1867, %v2003
      %v2005 = vpop.f32.mrf.mxu0
      %2006 = vmatprep.mubr.f32.mxu0 0.0
      %2007 = vmatmul.mubr.f32.gmra.mxu0 %v1885
      %v2008 = vpop.f32.mrf.mxu0
      %v2009 = vadd.f32 %v1867, %v2008
      %v2010 = vpop.f32.mrf.mxu0
      %2011 = vmatprep.mubr.f32.mxu0 0.0
      %2012 = vmatmul.mubr.f32.gmra.mxu0 %v1888
      %v2013 = vpop.f32.mrf.mxu0
      %v2014 = vadd.f32 %v1867, %v2013
      %v2015 = vpop.f32.mrf.mxu0
      %2016 = vmatprep.mubr.f32.mxu0 0.0
      %2017 = vmatmul.mubr.f32.gmra.mxu0 %v1891
      %v2018 = vpop.f32.mrf.mxu0
      %v2019 = vadd.f32 %v1867, %v2018
      %v2020 = vpop.f32.mrf.mxu0
      %2021 = vmatprep.mubr.f32.mxu0 0.0
      %2022 = vmatmul.mubr.f32.gmra.mxu0 %v1894
      %v2023 = vpop.f32.mrf.mxu0
      %v2024 = vadd.f32 %v1867, %v2023
      %v2025 = vpop.f32.mrf.mxu0
      %2026 = vmatprep.mubr.f32.mxu0 0.0
      %2027 = vmatmul.mubr.f32.gmra.mxu0 %v1897
      %v2028 = vpop.f32.mrf.mxu0
      %v2029 = vadd.f32 %v1867, %v2028
      %v2030 = vpop.f32.mrf.mxu0
      %2031 = vmatprep.mubr.f32.mxu0 0.0
      %2032 = vmatmul.mubr.f32.gmra.mxu0 %v1900
      %v2033 = vpop.f32.mrf.mxu0
      %v2034 = vadd.f32 %v1867, %v2033
      %v2035 = vpop.f32.mrf.mxu0
      %2036 = vmatprep.mubr.f32.mxu0 0.0
      %2037 = vmatmul.mubr.f32.gmra.mxu0 %v1903
      %v2038 = vpop.f32.mrf.mxu0
      %v2039 = vadd.f32 %v1867, %v2038
      %v2040 = vpop.f32.mrf.mxu0
      %2041 = vmatprep.mubr.f32.mxu0 0.0
      %2042 = vmatmul.mubr.f32.gmra.mxu0 %v1906
      %v2043 = vpop.f32.mrf.mxu0
      %v2044 = vadd.f32 %v1867, %v2043
      %v2045 = vpop.f32.mrf.mxu0
      %2046 = vmatprep.mubr.f32.mxu0 0.0
      %2047 = vmatmul.mubr.f32.gmra.mxu0 %v1909
      %v2048 = vpop.f32.mrf.mxu0
      %v2049 = vadd.f32 %v1867, %v2048
      %v2050 = vpop.f32.mrf.mxu0
      %2051 = vmatprep.mubr.f32.mxu0 0.0
      %2052 = vmatmul.mubr.f32.gmra.mxu0 %v1912
      %v2053 = vpop.f32.mrf.mxu0
      %v2054 = vadd.f32 %v1867, %v2053
      %v2055 = vpop.f32.mrf.mxu0
      %2056 = vmatprep.mubr.f32.mxu0 0.0
      %2057 = vmatmul.mubr.f32.gmra.mxu0 %v1915
      %v2058 = vpop.f32.mrf.mxu0
      %v2059 = vadd.f32 %v1867, %v2058
      %v2060 = vpop.f32.mrf.mxu0
      %2061 = vdwg.mxu0
      %2062 = vst.msk [vmem:[%s559] sm:$0xff] %vm1402, %v1984
      %2063 = vst.msk [vmem:[%s559 + $0x8] sm:$0xff] %vm1402, %v1989
      %2064 = vst.msk [vmem:[%s559 + $0x10] sm:$0xff] %vm1402, %v1994
      %2065 = vst.msk [vmem:[%s559 + $0x18] sm:$0xff] %vm1402, %v1999
      %2066 = vst.msk [vmem:[%s559 + $0x20] sm:$0xff] %vm1402, %v2004
      %2067 = vst.msk [vmem:[%s559 + $0x28] sm:$0xff] %vm1402, %v2009
      %2068 = vst.msk [vmem:[%s559 + $0x30] sm:$0xff] %vm1402, %v2014
      %2069 = vst.msk [vmem:[%s559 + $0x38] sm:$0xff] %vm1402, %v2019
      %2070 = vst.msk [vmem:[%s559 + $0x40] sm:$0xff] %vm1402, %v2024
      %2071 = vst.msk [vmem:[%s559 + $0x48] sm:$0xff] %vm1402, %v2029
      %2072 = vst.msk [vmem:[%s559 + $0x50] sm:$0xff] %vm1402, %v2034
      %2073 = vst.msk [vmem:[%s559 + $0x58] sm:$0xff] %vm1402, %v2039
      %2074 = vst.msk [vmem:[%s559 + $0x60] sm:$0xff] %vm1402, %v2044
      %2075 = vst.msk [vmem:[%s559 + $0x68] sm:$0xff] %vm1402, %v2049
      %2076 = vst.msk [vmem:[%s559 + $0x70] sm:$0xff] %vm1402, %v2054
      %2077 = vst.msk [vmem:[%s559 + $0x78] sm:$0xff] %vm1402, %v2059
      %s2078 = smul.u32 16, %s32
      %p2079 = scmp.lt.s32.totalorder %s31, 1
      %s2080 = scalar_select %p2079, %s31, 1
      %p2081 = scmp.lt.s32.totalorder %s2078, 15
      %s2082 = scalar_select %p2081, %s2078, 15
      %s2083 = smul.addr %s2080, 16
      %s2084 = sadd.s32 %s2082, %s2083
      %s2085 = smul.addr %s2084, 8
      %s2086 = scalar_lea.vmem %s16, %s2085
      // Predicated region
      $region85: #{tpu_custom_call.1} parent=83 // pred_check
        %p2087 = pneg %p405
      $region86: #{tpu_custom_call.1} parent=83 // pred_check_branch
        %2089 = sbr.rel (%p2087) target = $region88
      $region87: #{tpu_custom_call.1} parent=83 // pred_region
        %s2090 = smul.u32 16, %s32
      $region88: #{tpu_custom_call.1} parent=83 // pred_fallthru
        _
    $region84: #{tpu_custom_call.1} parent=5 // pred_fallthru
      _
    %p2091 = scmp.le.s32.totalorder 2, %s22
    // Predicated region
    $region89: #{tpu_custom_call.1} parent=5 // pred_check
      %p2092 = pneg %p2091
    $region90: #{tpu_custom_call.1} parent=5 // pred_check_branch
      %2094 = sbr.rel (%p2092) target = $region92
    $region91: #{tpu_custom_call.1} parent=5 // pred_region
      %s2095 = ssub.s32 %s22, 2
      // Predicated region
      $region93: #{tpu_custom_call.1} parent=91 // pred_check
        %p2096 = pneg %p411
      $region94: #{tpu_custom_call.1} parent=91 // pred_check_branch
        %2098 = sbr.rel (%p2096) target = $region96
      $region95: #{tpu_custom_call.1} parent=91 // pred_region
        %s2099 = smul.u32 16, %s34
        %p2100 = scmp.lt.s32.totalorder %s33, 1
        %s2101 = scalar_select %p2100, %s33, 1
        %p2102 = scmp.lt.s32.totalorder %s2099, 15
        %s2103 = scalar_select %p2102, %s2099, 15
        %s2104 = smul.addr %s2101, 16
        %s2105 = sadd.s32 %s2103, %s2104
        %s2106 = smul.addr %s2105, 8
        %s2107 = scalar_lea.vmem %s16, %s2106
      $region96: #{tpu_custom_call.1} parent=91 // pred_fallthru
        _
    $region92: #{tpu_custom_call.1} parent=5 // pred_fallthru
      _
  $region6: #{tpu_custom_call.1} parent=0 // loop_footer
    %s26 = sadd.s32 1, %s22
  $region7: #{tpu_custom_call.1} parent=0 // loop_footer_branch
    %21 = sbr.rel target = $region3
  $region8: #{tpu_custom_call.1} parent=0 // loop_exit
    _

</llo_original>
